<compile_context>
chip_gen: v5e
topology: v5e:2x2
jax: 0.10.0
libtpu: 0.0.40
codegen_flags: <defaults>
</compile_context>

<pallas_src>
import numpy as np
import jax
import jax.numpy as jnp
from jax import lax
from jax.experimental import pallas as pl
from jax.experimental.pallas import tpu as pltpu

INPUT_DIM = 128
KERNEL_SIZE = 4
STRIDE = 2
PAD = 1
LRELU_SLOPE = 0.2
CIN_PAD = 4          # pad RGB 3 -> 4 so layer-1 lanes are 128-aligned
H_IN = 32
W_IN = 32


# -----------------------------------------------------------------------------
# Fused Pallas kernel: whole encoder for one batch block of NB samples.
# Activation layout: rows = (n_local, h), cols = (w, c); col width 16*dim = 128.
# -----------------------------------------------------------------------------
def _encoder_kernel(x_ref,
                    b1_ref, c1_ref,
                    r2_ref, b2_ref, c2_ref,
                    r3_ref, b3_ref, c3_ref,
                    r4_ref, b4_ref, c4_ref,
                    o_ref):
    def gemm_bias(x_bf16, b_ref, c_ref, lrelu):
        # One MXU dot (bf16 x bf16 -> f32) + bias row + optional LeakyReLU(0.2).
        y = jnp.dot(x_bf16, b_ref[...], preferred_element_type=jnp.float32)
        y = y + c_ref[...]
        if lrelu:
            y = jnp.maximum(y, LRELU_SLOPE * y)
        return y

    def tap_concat(h_f32, r_ref):
        # Stride-2 / padded row selection for the 4 kh taps as ONE stacked dot
        # (Rstack @ X), then the 4 tap groups are concatenated along lanes so
        # the following conv contraction is a single K=4*WC GEMM.
        s = jnp.dot(r_ref[...], h_f32.astype(jnp.bfloat16),
                    preferred_element_type=jnp.float32)
        m = s.shape[0] // KERNEL_SIZE
        parts = [s[t * m:(t + 1) * m, :] for t in range(KERNEL_SIZE)]
        return jnp.concatenate(parts, axis=1).astype(jnp.bfloat16)

    h = gemm_bias(x_ref[...], b1_ref, c1_ref, True)              # (NB*16, 16*dim)
    h = gemm_bias(tap_concat(h, r2_ref), b2_ref, c2_ref, True)   # (NB*8,  8*2dim)
    h = gemm_bias(tap_concat(h, r3_ref), b3_ref, c3_ref, True)   # (NB*4,  4*4dim)
    h = gemm_bias(tap_concat(h, r4_ref), b4_ref, c4_ref, False)  # (NB, 128) Linear
    o_ref[...] = h.astype(o_ref.dtype)


def _fused_encoder(x2d, operands, batch, nb):
    args = (x2d,) + tuple(operands)
    steps = batch // nb

    in_specs = [pl.BlockSpec((nb * 16, x2d.shape[1]), lambda i: (i, 0))]
    # Constants: same block every grid step -> no re-DMA across steps.
    in_specs += [pl.BlockSpec(a.shape, lambda i: (0, 0)) for a in operands]
    out_specs = pl.BlockSpec((nb, INPUT_DIM), lambda i: (i, 0))

    # Advisory cost estimate (helps XLA schedule around the custom call).
    b1, _, r2, b2, _, r3, b3, _, r4, b4, _ = operands
    df = lambda m, k, n: 2 * m * k * n
    flops = df(nb * 16, b1.shape[0], b1.shape[1])
    for r, bprev, b in ((r2, b1, b2), (r3, b2, b3), (r4, b3, b4)):
        flops += df(r.shape[0], r.shape[1], bprev.shape[1])
        flops += df(r.shape[0] // 4, b.shape[0], b.shape[1])
    flops *= steps
    bytes_accessed = sum(int(a.size) * a.dtype.itemsize for a in args)
    bytes_accessed += batch * INPUT_DIM * 4

    return pl.pallas_call(
        _encoder_kernel,
        out_shape=jax.ShapeDtypeStruct((batch, INPUT_DIM), jnp.float32),
        grid=(steps,),
        in_specs=in_specs,
        out_specs=out_specs,
        compiler_params=pltpu.CompilerParams(
            dimension_semantics=("parallel",)),   # v7x: split batch over both TCs
        cost_estimate=pl.CostEstimate(flops=flops, transcendentals=0,
                                      bytes_accessed=bytes_accessed),
    )(*args)


@jax.jit
def encoder_forward(x_nchw, operands):
    """PyTorch Encoder.forward.  x_nchw: (N, 3, 32, 32) -> (N, 128)."""
    n, c, h, w = x_nchw.shape
    assert (c, h, w) == (3, H_IN, W_IN), "Encoder expects (N, 3, 32, 32)."
    r4 = operands[8]
    nb = r4.shape[1] // KERNEL_SIZE        # samples per grid block (baked into R*)
    assert n % nb == 0, "batch must be a multiple of the prepared block size"

    # Cheap XLA layout work (tiny tensor): NCHW -> NHWC, pad cin 3->4 and height
    # by 1, and extract the 4 stride-2 kh tap row-sets so layer 1 needs no row
    # selection inside the kernel.  Result: rows=(n, oh1), cols=(kh, w, c4) = 512.
    x = jnp.transpose(x_nchw, (0, 2, 3, 1))                      # (N, 32, 32, 3)
    x = jnp.pad(x, ((0, 0), (1, 1), (0, 0), (0, CIN_PAD - 3)))   # (N, 34, 32, 4)
    taps = [x[:, kh:kh + 31:2, :, :].reshape(n, 16, W_IN * CIN_PAD)
            for kh in range(KERNEL_SIZE)]
    x2d = jnp.concatenate(taps, axis=-1).reshape(n * 16, KERNEL_SIZE * W_IN * CIN_PAD)
    x2d = x2d.astype(jnp.bfloat16)
    return _fused_encoder(x2d, operands, n, nb)


# -----------------------------------------------------------------------------
# One-time preparation of the constant banded / selection matrices.
# (Runs once per parameter set; NOT part of the per-forward hot path.)
# -----------------------------------------------------------------------------
def _conv_bcat(w_oihw, bias, w_in, cin_pad):
    """Conv2d(k=4, s=2, p=1) width taps + channel contraction folded into one
       banded matrix per kh tap, concatenated along K: Bcat is (4*w_in*cin_pad, ow*cout)."""
    w_np = np.asarray(w_oihw, np.float32)
    cout, cin, kh_sz, kw_sz = w_np.shape
    ow = w_in // STRIDE
    B = np.zeros((kh_sz, w_in * cin_pad, ow * cout), np.float32)
    for kh in range(kh_sz):
        for o in range(ow):
            for kw in range(kw_sz):
                win = STRIDE * o + kw - PAD
                if 0 <= win < w_in:
                    B[kh, win * cin_pad: win * cin_pad + cin,
                          o * cout:(o + 1) * cout] = w_np[:, :, kh, kw].T
    bias_row = np.tile(np.asarray(bias, np.float32), ow)[None, :]
    return B.reshape(kh_sz * w_in * cin_pad, ow * cout), bias_row


def _linear_bcat(wl, bl, dim):
    """Final Linear(4*4*4*dim, 128) with PyTorch's (C,H,W) flatten order folded
       into the weights; taps are over h, lane blocks ordered (w, c) per tap."""
    c3 = 4 * dim
    wl_r = np.asarray(wl, np.float32).reshape(INPUT_DIM, c3, 4, 4)   # (k, c, h, w)
    wc3 = 4 * c3
    B = np.zeros((4, wc3, INPUT_DIM), np.float32)
    for t in range(4):
        # B[t, w*c3 + c, k] = wl[k, c*16 + t*4 + w]
        B[t] = np.transpose(wl_r[:, :, t, :], (2, 1, 0)).reshape(wc3, INPUT_DIM)
    return B.reshape(4 * wc3, INPUT_DIM), np.asarray(bl, np.float32)[None, :]


def _rstack_conv(nb, h_in):
    """Stacked 0/1 row-selection: row t*(nb*oh)+n*oh+o picks input row n*h_in + 2o+t-1
       (zero row implements the height padding).  Batch-block-local (size nb only)."""
    oh = h_in // STRIDE
    R = np.zeros((KERNEL_SIZE * nb * oh, nb * h_in), np.float32)
    for t in range(KERNEL_SIZE):
        for n in range(nb):
            for o in range(oh):
                hh = STRIDE * o + t - PAD
                if 0 <= hh < h_in:
                    R[t * nb * oh + n * oh + o, n * h_in + hh] = 1.0
    return R


def _rstack_linear(nb):
    R = np.zeros((KERNEL_SIZE * nb, nb * 4), np.float32)
    for t in range(KERNEL_SIZE):
        for n in range(nb):
            R[t * nb + n, n * 4 + t] = 1.0
    return R


def prepare_encoder_operands(params, nb, dim, const_dtype=jnp.bfloat16):
    """nb = samples per grid block (NOT the total batch); R/B sizes depend only on nb/dim."""
    assert params["wl"].shape == (INPUT_DIM, 4 * 4 * 4 * dim)
    b1, c1 = _conv_bcat(params["w1"], params["b1"], w_in=W_IN, cin_pad=CIN_PAD)
    b2, c2 = _conv_bcat(params["w2"], params["b2"], w_in=16, cin_pad=dim)
    b3, c3 = _conv_bcat(params["w3"], params["b3"], w_in=8, cin_pad=2 * dim)
    b4, c4 = _linear_bcat(params["wl"], params["bl"], dim)
    r2 = _rstack_conv(nb, 16)
    r3 = _rstack_conv(nb, 8)
    r4 = _rstack_linear(nb)
    w = lambda a: jnp.asarray(a, const_dtype)     # bf16: halves constant DMA
    f = lambda a: jnp.asarray(a, jnp.float32)     # biases stay f32 (tiny)
    return (w(b1), f(c1), w(r2), w(b2), f(c2),
            w(r3), w(b3), f(c3), w(r4), w(b4), f(c4))


# -----------------------------------------------------------------------------
# Parameters (PyTorch layouts) + pure-JAX reference for correctness checking
# -----------------------------------------------------------------------------
def init_encoder_params(key, dim, dtype=jnp.float32):
    ks = jax.random.split(key, 8)
    scale = 0.05
    return {
        "w1": scale * jax.random.normal(ks[0], (dim, 3, 4, 4), dtype),
        "b1": scale * jax.random.normal(ks[1], (dim,), dtype),
        "w2": scale * jax.random.normal(ks[2], (2 * dim, dim, 4, 4), dtype),
        "b2": scale * jax.random.normal(ks[3], (2 * dim,), dtype),
        "w3": scale * jax.random.normal(ks[4], (4 * dim, 2 * dim, 4, 4), dtype),
        "b3": scale * jax.random.normal(ks[5], (4 * dim,), dtype),
        "wl": scale * jax.random.normal(ks[6], (INPUT_DIM, 4 * 4 * 4 * dim), dtype),
        "bl": scale * jax.random.normal(ks[7], (INPUT_DIM,), dtype),
    }


def _ref_conv_lrelu(x, w, b):
    y = lax.conv_general_dilated(
        x, w, window_strides=(STRIDE, STRIDE), padding=((PAD, PAD), (PAD, PAD)),
        dimension_numbers=("NCHW", "OIHW", "NCHW"))
    y = y + b.reshape(1, -1, 1, 1)
    return jnp.where(y > 0, y, LRELU_SLOPE * y)


def encoder_forward_ref(params, x, dim):
    h = _ref_conv_lrelu(x, params["w1"], params["b1"])
    h = _ref_conv_lrelu(h, params["w2"], params["b2"])
    h = _ref_conv_lrelu(h, params["w3"], params["b3"])
    flat = h.reshape(-1, 4 * 4 * 4 * dim)          # PyTorch .view (C,H,W order)
    return flat @ params["wl"].T + params["bl"]


if __name__ == "__main__":
    dim = 8
    batch = 16                                  # input must be 32x32 spatial
    nb = 8 if batch % 8 == 0 else batch         # 8 samples/block -> grid=(2,) ("parallel")
    key = jax.random.PRNGKey(0)
    k_x, k_p = jax.random.split(key)

    x = jax.random.normal(k_x, (batch, 3, H_IN, W_IN), jnp.float32)
    params = init_encoder_params(k_p, dim)

    # One-time prep: stride/padding, cin-pad, flatten order and tap concat all
    # folded into constant bf16 matrices consumed by the single fused kernel.
    operands = prepare_encoder_operands(params, nb, dim)

    out = jax.block_until_ready(encoder_forward(x, operands))
    assert out.shape == (batch, INPUT_DIM), out.shape

    ref = jax.block_until_ready(encoder_forward_ref(params, x, dim))
    max_err = float(jnp.max(jnp.abs(out - ref)))
    # bf16 operands with f32 accumulation: errors stay in the few-1e-3 range here.
    assert jnp.allclose(out, ref, atol=2e-2, rtol=2e-2), max_err

    print("KERNEL_OK")
</pallas_src>

<mosaic_0001>
module attributes {stable_mosaic.version = 11 : i64} {
  func.func @_encoder_kernel(%arg0: i32, %arg1: memref<128x512xbf16, #tpu.memory_space<vmem>>, %arg2: memref<512x128xbf16, #tpu.memory_space<vmem>>, %arg3: memref<1x128xf32, #tpu.memory_space<vmem>>, %arg4: memref<256x128xbf16, #tpu.memory_space<vmem>>, %arg5: memref<512x128xbf16, #tpu.memory_space<vmem>>, %arg6: memref<1x128xf32, #tpu.memory_space<vmem>>, %arg7: memref<128x64xbf16, #tpu.memory_space<vmem>>, %arg8: memref<512x128xbf16, #tpu.memory_space<vmem>>, %arg9: memref<1x128xf32, #tpu.memory_space<vmem>>, %arg10: memref<32x32xbf16, #tpu.memory_space<vmem>>, %arg11: memref<512x128xbf16, #tpu.memory_space<vmem>>, %arg12: memref<1x128xf32, #tpu.memory_space<vmem>>, %arg13: memref<8x128xf32, #tpu.memory_space<vmem>>) attributes {dimension_semantics = [#tpu.dimension_semantics<parallel>], iteration_bounds = array<i64: 2>, scalar_prefetch = 0 : i64, scratch_operands = 0 : i64, tpu.core_type = #tpu.core_type<tc>, window_params = [{transform_indices = @transform_0, window_bounds = array<i64: 128, 512>}, {pipeline_mode = #tpu.pipeline_mode<synchronous>, transform_indices = @transform_1, window_bounds = array<i64: 512, 128>}, {pipeline_mode = #tpu.pipeline_mode<synchronous>, transform_indices = @transform_2, window_bounds = array<i64: 1, 128>}, {pipeline_mode = #tpu.pipeline_mode<synchronous>, transform_indices = @transform_3, window_bounds = array<i64: 256, 128>}, {pipeline_mode = #tpu.pipeline_mode<synchronous>, transform_indices = @transform_4, window_bounds = array<i64: 512, 128>}, {pipeline_mode = #tpu.pipeline_mode<synchronous>, transform_indices = @transform_5, window_bounds = array<i64: 1, 128>}, {pipeline_mode = #tpu.pipeline_mode<synchronous>, transform_indices = @transform_6, window_bounds = array<i64: 128, 64>}, {pipeline_mode = #tpu.pipeline_mode<synchronous>, transform_indices = @transform_7, window_bounds = array<i64: 512, 128>}, {pipeline_mode = #tpu.pipeline_mode<synchronous>, transform_indices = @transform_8, window_bounds = array<i64: 1, 128>}, {pipeline_mode = #tpu.pipeline_mode<synchronous>, transform_indices = @transform_9, window_bounds = array<i64: 32, 32>}, {pipeline_mode = #tpu.pipeline_mode<synchronous>, transform_indices = @transform_10, window_bounds = array<i64: 512, 128>}, {pipeline_mode = #tpu.pipeline_mode<synchronous>, transform_indices = @transform_11, window_bounds = array<i64: 1, 128>}, {transform_indices = @transform_12, window_bounds = array<i64: 8, 128>}]} {
    %c0 = arith.constant 0 : index
    %c0_0 = arith.constant 0 : index
    %0 = vector.load %arg1[%c0, %c0_0] : memref<128x512xbf16, #tpu.memory_space<vmem>>, vector<128x512xbf16>
    %c0_1 = arith.constant 0 : index
    %c0_2 = arith.constant 0 : index
    %1 = vector.load %arg2[%c0_1, %c0_2] : memref<512x128xbf16, #tpu.memory_space<vmem>>, vector<512x128xbf16>
    %cst = arith.constant dense<0.000000e+00> : vector<128x128xf32>
    %2 = tpu.matmul %0, %1, %cst {dimension_numbers = #tpu.dot_dimension_numbers<[1], [0], [0], [1], [0, 0, 1, 1], [], []>} : vector<128x512xbf16>, vector<512x128xbf16>, vector<128x128xf32> -> vector<128x128xf32>
    %c0_3 = arith.constant 0 : index
    %c0_4 = arith.constant 0 : index
    %3 = vector.load %arg3[%c0_3, %c0_4] : memref<1x128xf32, #tpu.memory_space<vmem>>, vector<1x128xf32>
    %4 = vector.broadcast %3 : vector<1x128xf32> to vector<128x128xf32>
    %5 = arith.addf %2, %4 : vector<128x128xf32>
    %cst_5 = arith.constant 2.000000e-01 : f32
    %6 = vector.broadcast %cst_5 : f32 to vector<128x128xf32>
    %7 = arith.mulf %6, %5 : vector<128x128xf32>
    %8 = arith.maximumf %5, %7 : vector<128x128xf32>
    %c0_6 = arith.constant 0 : index
    %c0_7 = arith.constant 0 : index
    %9 = vector.load %arg4[%c0_6, %c0_7] : memref<256x128xbf16, #tpu.memory_space<vmem>>, vector<256x128xbf16>
    %10 = arith.truncf %8 : vector<128x128xf32> to vector<128x128xbf16>
    %cst_8 = arith.constant dense<0.000000e+00> : vector<256x128xf32>
    %11 = tpu.matmul %9, %10, %cst_8 {dimension_numbers = #tpu.dot_dimension_numbers<[1], [0], [0], [1], [0, 0, 1, 1], [], []>} : vector<256x128xbf16>, vector<128x128xbf16>, vector<256x128xf32> -> vector<256x128xf32>
    %12 = vector.extract_strided_slice %11 {offsets = [0, 0], sizes = [64, 128], strides = [1, 1]} : vector<256x128xf32> to vector<64x128xf32>
    %13 = vector.extract_strided_slice %11 {offsets = [64, 0], sizes = [64, 128], strides = [1, 1]} : vector<256x128xf32> to vector<64x128xf32>
    %14 = vector.extract_strided_slice %11 {offsets = [128, 0], sizes = [64, 128], strides = [1, 1]} : vector<256x128xf32> to vector<64x128xf32>
    %15 = vector.extract_strided_slice %11 {offsets = [192, 0], sizes = [64, 128], strides = [1, 1]} : vector<256x128xf32> to vector<64x128xf32>
    %16 = tpu.concatenate %12, %13, %14, %15 in 1 : vector<64x128xf32>, vector<64x128xf32>, vector<64x128xf32>, vector<64x128xf32> -> vector<64x512xf32>
    %17 = arith.truncf %16 : vector<64x512xf32> to vector<64x512xbf16>
    %c0_9 = arith.constant 0 : index
    %c0_10 = arith.constant 0 : index
    %18 = vector.load %arg5[%c0_9, %c0_10] : memref<512x128xbf16, #tpu.memory_space<vmem>>, vector<512x128xbf16>
    %cst_11 = arith.constant dense<0.000000e+00> : vector<64x128xf32>
    %19 = tpu.matmul %17, %18, %cst_11 {dimension_numbers = #tpu.dot_dimension_numbers<[1], [0], [0], [1], [0, 0, 1, 1], [], []>} : vector<64x512xbf16>, vector<512x128xbf16>, vector<64x128xf32> -> vector<64x128xf32>
    %c0_12 = arith.constant 0 : index
    %c0_13 = arith.constant 0 : index
    %20 = vector.load %arg6[%c0_12, %c0_13] : memref<1x128xf32, #tpu.memory_space<vmem>>, vector<1x128xf32>
    %21 = vector.broadcast %20 : vector<1x128xf32> to vector<64x128xf32>
    %22 = arith.addf %19, %21 : vector<64x128xf32>
    %cst_14 = arith.constant 2.000000e-01 : f32
    %23 = vector.broadcast %cst_14 : f32 to vector<64x128xf32>
    %24 = arith.mulf %23, %22 : vector<64x128xf32>
    %25 = arith.maximumf %22, %24 : vector<64x128xf32>
    %c0_15 = arith.constant 0 : index
    %c0_16 = arith.constant 0 : index
    %26 = vector.load %arg7[%c0_15, %c0_16] : memref<128x64xbf16, #tpu.memory_space<vmem>>, vector<128x64xbf16>
    %27 = arith.truncf %25 : vector<64x128xf32> to vector<64x128xbf16>
    %cst_17 = arith.constant dense<0.000000e+00> : vector<128x128xf32>
    %28 = tpu.matmul %26, %27, %cst_17 {dimension_numbers = #tpu.dot_dimension_numbers<[1], [0], [0], [1], [0, 0, 1, 1], [], []>} : vector<128x64xbf16>, vector<64x128xbf16>, vector<128x128xf32> -> vector<128x128xf32>
    %29 = vector.extract_strided_slice %28 {offsets = [0, 0], sizes = [32, 128], strides = [1, 1]} : vector<128x128xf32> to vector<32x128xf32>
    %30 = vector.extract_strided_slice %28 {offsets = [32, 0], sizes = [32, 128], strides = [1, 1]} : vector<128x128xf32> to vector<32x128xf32>
    %31 = vector.extract_strided_slice %28 {offsets = [64, 0], sizes = [32, 128], strides = [1, 1]} : vector<128x128xf32> to vector<32x128xf32>
    %32 = vector.extract_strided_slice %28 {offsets = [96, 0], sizes = [32, 128], strides = [1, 1]} : vector<128x128xf32> to vector<32x128xf32>
    %33 = tpu.concatenate %29, %30, %31, %32 in 1 : vector<32x128xf32>, vector<32x128xf32>, vector<32x128xf32>, vector<32x128xf32> -> vector<32x512xf32>
    %34 = arith.truncf %33 : vector<32x512xf32> to vector<32x512xbf16>
    %c0_18 = arith.constant 0 : index
    %c0_19 = arith.constant 0 : index
    %35 = vector.load %arg8[%c0_18, %c0_19] : memref<512x128xbf16, #tpu.memory_space<vmem>>, vector<512x128xbf16>
    %cst_20 = arith.constant dense<0.000000e+00> : vector<32x128xf32>
    %36 = tpu.matmul %34, %35, %cst_20 {dimension_numbers = #tpu.dot_dimension_numbers<[1], [0], [0], [1], [0, 0, 1, 1], [], []>} : vector<32x512xbf16>, vector<512x128xbf16>, vector<32x128xf32> -> vector<32x128xf32>
    %c0_21 = arith.constant 0 : index
    %c0_22 = arith.constant 0 : index
    %37 = vector.load %arg9[%c0_21, %c0_22] : memref<1x128xf32, #tpu.memory_space<vmem>>, vector<1x128xf32>
    %38 = vector.broadcast %37 : vector<1x128xf32> to vector<32x128xf32>
    %39 = arith.addf %36, %38 : vector<32x128xf32>
    %cst_23 = arith.constant 2.000000e-01 : f32
    %40 = vector.broadcast %cst_23 : f32 to vector<32x128xf32>
    %41 = arith.mulf %40, %39 : vector<32x128xf32>
    %42 = arith.maximumf %39, %41 : vector<32x128xf32>
    %c0_24 = arith.constant 0 : index
    %c0_25 = arith.constant 0 : index
    %43 = vector.load %arg10[%c0_24, %c0_25] : memref<32x32xbf16, #tpu.memory_space<vmem>>, vector<32x32xbf16>
    %44 = arith.truncf %42 : vector<32x128xf32> to vector<32x128xbf16>
    %cst_26 = arith.constant dense<0.000000e+00> : vector<32x128xf32>
    %45 = tpu.matmul %43, %44, %cst_26 {dimension_numbers = #tpu.dot_dimension_numbers<[1], [0], [0], [1], [0, 0, 1, 1], [], []>} : vector<32x32xbf16>, vector<32x128xbf16>, vector<32x128xf32> -> vector<32x128xf32>
    %46 = vector.extract_strided_slice %45 {offsets = [0, 0], sizes = [8, 128], strides = [1, 1]} : vector<32x128xf32> to vector<8x128xf32>
    %47 = vector.extract_strided_slice %45 {offsets = [8, 0], sizes = [8, 128], strides = [1, 1]} : vector<32x128xf32> to vector<8x128xf32>
    %48 = vector.extract_strided_slice %45 {offsets = [16, 0], sizes = [8, 128], strides = [1, 1]} : vector<32x128xf32> to vector<8x128xf32>
    %49 = vector.extract_strided_slice %45 {offsets = [24, 0], sizes = [8, 128], strides = [1, 1]} : vector<32x128xf32> to vector<8x128xf32>
    %50 = tpu.concatenate %46, %47, %48, %49 in 1 : vector<8x128xf32>, vector<8x128xf32>, vector<8x128xf32>, vector<8x128xf32> -> vector<8x512xf32>
    %51 = arith.truncf %50 : vector<8x512xf32> to vector<8x512xbf16>
    %c0_27 = arith.constant 0 : index
    %c0_28 = arith.constant 0 : index
    %52 = vector.load %arg11[%c0_27, %c0_28] : memref<512x128xbf16, #tpu.memory_space<vmem>>, vector<512x128xbf16>
    %cst_29 = arith.constant dense<0.000000e+00> : vector<8x128xf32>
    %53 = tpu.matmul %51, %52, %cst_29 {dimension_numbers = #tpu.dot_dimension_numbers<[1], [0], [0], [1], [0, 0, 1, 1], [], []>} : vector<8x512xbf16>, vector<512x128xbf16>, vector<8x128xf32> -> vector<8x128xf32>
    %c0_30 = arith.constant 0 : index
    %c0_31 = arith.constant 0 : index
    %54 = vector.load %arg12[%c0_30, %c0_31] : memref<1x128xf32, #tpu.memory_space<vmem>>, vector<1x128xf32>
    %55 = vector.broadcast %54 : vector<1x128xf32> to vector<8x128xf32>
    %56 = arith.addf %53, %55 : vector<8x128xf32>
    %c0_32 = arith.constant 0 : index
    %c0_33 = arith.constant 0 : index
    %57 = vector.load %arg13[%c0_32, %c0_33] : memref<8x128xf32, #tpu.memory_space<vmem>>, vector<8x128xf32>
    tpu.vector_store %arg13[%c0_32, %c0_33], %56 {strides = array<i32>} : memref<8x128xf32, #tpu.memory_space<vmem>>, vector<8x128xf32>,
    return
  }
  func.func @transform_0(%arg0: i32) -> (i32, i32) {
    %c0_i32 = arith.constant 0 : i32
    %c0_i32_0 = arith.constant 0 : i32
    return %arg0, %c0_i32 : i32, i32
  }
  func.func @transform_1(%arg0: i32) -> (i32, i32) {
    %c0_i32 = arith.constant 0 : i32
    %c0_i32_0 = arith.constant 0 : i32
    %c0_i32_1 = arith.constant 0 : i32
    return %c0_i32, %c0_i32_0 : i32, i32
  }
  func.func @transform_2(%arg0: i32) -> (i32, i32) {
    %c0_i32 = arith.constant 0 : i32
    %c0_i32_0 = arith.constant 0 : i32
    %c0_i32_1 = arith.constant 0 : i32
    return %c0_i32, %c0_i32_0 : i32, i32
  }
  func.func @transform_3(%arg0: i32) -> (i32, i32) {
    %c0_i32 = arith.constant 0 : i32
    %c0_i32_0 = arith.constant 0 : i32
    %c0_i32_1 = arith.constant 0 : i32
    return %c0_i32, %c0_i32_0 : i32, i32
  }
  func.func @transform_4(%arg0: i32) -> (i32, i32) {
    %c0_i32 = arith.constant 0 : i32
    %c0_i32_0 = arith.constant 0 : i32
    %c0_i32_1 = arith.constant 0 : i32
    return %c0_i32, %c0_i32_0 : i32, i32
  }
  func.func @transform_5(%arg0: i32) -> (i32, i32) {
    %c0_i32 = arith.constant 0 : i32
    %c0_i32_0 = arith.constant 0 : i32
    %c0_i32_1 = arith.constant 0 : i32
    return %c0_i32, %c0_i32_0 : i32, i32
  }
  func.func @transform_6(%arg0: i32) -> (i32, i32) {
    %c0_i32 = arith.constant 0 : i32
    %c0_i32_0 = arith.constant 0 : i32
    %c0_i32_1 = arith.constant 0 : i32
    return %c0_i32, %c0_i32_0 : i32, i32
  }
  func.func @transform_7(%arg0: i32) -> (i32, i32) {
    %c0_i32 = arith.constant 0 : i32
    %c0_i32_0 = arith.constant 0 : i32
    %c0_i32_1 = arith.constant 0 : i32
    return %c0_i32, %c0_i32_0 : i32, i32
  }
  func.func @transform_8(%arg0: i32) -> (i32, i32) {
    %c0_i32 = arith.constant 0 : i32
    %c0_i32_0 = arith.constant 0 : i32
    %c0_i32_1 = arith.constant 0 : i32
    return %c0_i32, %c0_i32_0 : i32, i32
  }
  func.func @transform_9(%arg0: i32) -> (i32, i32) {
    %c0_i32 = arith.constant 0 : i32
    %c0_i32_0 = arith.constant 0 : i32
    %c0_i32_1 = arith.constant 0 : i32
    return %c0_i32, %c0_i32_0 : i32, i32
  }
  func.func @transform_10(%arg0: i32) -> (i32, i32) {
    %c0_i32 = arith.constant 0 : i32
    %c0_i32_0 = arith.constant 0 : i32
    %c0_i32_1 = arith.constant 0 : i32
    return %c0_i32, %c0_i32_0 : i32, i32
  }
  func.func @transform_11(%arg0: i32) -> (i32, i32) {
    %c0_i32 = arith.constant 0 : i32
    %c0_i32_0 = arith.constant 0 : i32
    %c0_i32_1 = arith.constant 0 : i32
    return %c0_i32, %c0_i32_0 : i32, i32
  }
  func.func @transform_12(%arg0: i32) -> (i32, i32) {
    %c0_i32 = arith.constant 0 : i32
    %c0_i32_0 = arith.constant 0 : i32
    return %arg0, %c0_i32 : i32, i32
  }
}

</mosaic_0001>

<llo_original>
// kernel: encoder_forward.1
$region0: #{encoder_forward.1}
  #allocation0 [shape = 'u32[]', space=smem, size = 0x4, offset = 0x4, fixed_abs, tag = 'smem constant byte address 0x4 - core index']
  #allocation1 [shape = 'u32[72,128]{1,0:T(1,128)}', space=vmem, size = 0x9000, scoped, tag = 'internal scratch']
  %s0 = inlined_call_operand.vmem [shape: bf16[256,512], index: 0, kind: input, shape index: {}]
  %s1 = inlined_call_operand.vmem [shape: bf16[512,128], index: 1, kind: input, shape index: {}]
  %s2 = inlined_call_operand.vmem [shape: f32[1,128], index: 2, kind: input, shape index: {}]
  %s3 = inlined_call_operand.vmem [shape: bf16[256,128], index: 3, kind: input, shape index: {}]
  %s4 = inlined_call_operand.vmem [shape: bf16[512,128], index: 4, kind: input, shape index: {}]
  %s5 = inlined_call_operand.vmem [shape: f32[1,128], index: 5, kind: input, shape index: {}]
  %s6 = inlined_call_operand.vmem [shape: bf16[128,64], index: 6, kind: input, shape index: {}]
  %s7 = inlined_call_operand.vmem [shape: bf16[512,128], index: 7, kind: input, shape index: {}]
  %s8 = inlined_call_operand.vmem [shape: f32[1,128], index: 8, kind: input, shape index: {}]
  %s9 = inlined_call_operand.vmem [shape: bf16[32,32], index: 9, kind: input, shape index: {}]
  %s10 = inlined_call_operand.vmem [shape: bf16[512,128], index: 10, kind: input, shape index: {}]
  %s11 = inlined_call_operand.vmem [shape: f32[1,128], index: 11, kind: input, shape index: {}]
  %s12 = inlined_call_operand.hbm [shape: f32[16,128], index: 12, kind: output, shape index: {}]
  %s13 = sld [smem:[#allocation0]]
  $region81: #{encoder_forward.1} parent=0
    _
  %s15 = ssub.s32 1, %s13
  %s16 = scalar_select 0, %s15, %s13
  $region1: #{encoder_forward.1} parent=0
    #allocation2 [shape = 'u8[8192]{0}', space=vmem, size = 0x2000, scoped, tag = 'output window, operand 0']
    #allocation3 [shape = 's32[2]{0}', space=sflag, size = 0x8, scoped, tag = 'scoped memory for encoder_forward.1']
    %17 = vsyncpa [#allocation3], 0
    %s18 = scalar_lea.sflag [#allocation3], 1
    %19 = vsyncpa %s18, 0
    loop: start=0, step=1, limit=4
    $region2: #{encoder_forward.1} parent=1 // loop_pre_header
      _
    $region3: #{encoder_forward.1} parent=1 // loop_header
      %s21 = sphi 0, %s25
      %p22 = scmp.ge.s32.totalorder %s21, 4
      %s31 = sphi 0, %s33
      %s34 = sphi 0, %s31
      %s35 = sphi 0, %s34
      %s51 = sphi 0, %s35
      %s55 = sphi 0, %s55
      %s57 = sphi 0, %s55
      %s58 = sphi 0, %s57
      %s72 = sphi 0, %s58
      %s76 = sphi 0, %s76
      %s78 = sphi 0, %s76
      %s79 = sphi 0, %s78
      %s93 = sphi 0, %s79
      %s97 = sphi 0, %s97
      %s99 = sphi 0, %s97
      %s100 = sphi 0, %s99
      %s114 = sphi 0, %s100
      %s118 = sphi 0, %s118
      %s120 = sphi 0, %s118
      %s121 = sphi 0, %s120
      %s135 = sphi 0, %s121
      %s139 = sphi 0, %s139
      %s141 = sphi 0, %s139
      %s142 = sphi 0, %s141
      %s156 = sphi 0, %s142
      %s160 = sphi 0, %s160
      %s162 = sphi 0, %s160
      %s163 = sphi 0, %s162
      %s177 = sphi 0, %s163
      %s181 = sphi 0, %s181
      %s183 = sphi 0, %s181
      %s184 = sphi 0, %s183
      %s198 = sphi 0, %s184
      %s202 = sphi 0, %s202
      %s204 = sphi 0, %s202
      %s205 = sphi 0, %s204
      %s219 = sphi 0, %s205
      %s223 = sphi 0, %s223
      %s225 = sphi 0, %s223
      %s226 = sphi 0, %s225
      %s240 = sphi 0, %s226
      %s244 = sphi 0, %s244
      %s246 = sphi 0, %s244
      %s247 = sphi 0, %s246
      %s261 = sphi 0, %s247
      %s265 = sphi 0, %s265
      %s267 = sphi 0, %s265
      %s268 = sphi 0, %s267
      %s282 = sphi 0, %s268
      %s288 = sphi 0, %s290
      %s291 = sphi 0, %s288
      %s292 = sphi 0, %s291
      %s308 = sphi 0, %s292
    $region4: #{encoder_forward.1} parent=1 // loop_header_branch
      %24 = sbr.rel (%p22) target = $region8
    $region5: #{encoder_forward.1} parent=1 // loop_body
      %s26 = ssub.s32 %s21, 1
      %s27 = ssub.s32 %s21, 2
      %s28 = sadd.s32 %s21, 1
      %s29 = ssub.s32 %s21, %s28
      %p30 = scmp.eq.s32.totalorder %s29, 0
      %s32 = sadd.s32 %s31, 1
      %s33 = scalar_select %p30, %s31, %s32
      %p36 = pneg %p30
      %p37 = scmp.eq.s32.totalorder %s21, 1
      %p38 = por %p36, %p37
      %p39 = scmp.ne.s32.totalorder %s31, %s34
      %p40 = scmp.eq.s32.totalorder %s21, 0
      %p41 = por %p39, %p40
      %p42 = scmp.ne.s32.totalorder %s31, %s34
      %p43 = scmp.eq.s32.totalorder %s26, 1
      %p44 = por %p42, %p43
      %p45 = scmp.ne.s32.totalorder %s34, %s35
      %p46 = scmp.eq.s32.totalorder %s26, 0
      %p47 = por %p45, %p46
      %p48 = scmp.ne.s32.totalorder %s34, %s35
      %p49 = scmp.eq.s32.totalorder %s27, 1
      %p50 = por %p48, %p49
      %p52 = scmp.ne.s32.totalorder %s35, %s51
      %p53 = scmp.eq.s32.totalorder %s27, 0
      %p54 = por %p52, %p53
      %s56 = sadd.s32 %s55, 1
      %p59 = scmp.eq.s32.totalorder %s21, 1
      %p60 = scmp.ne.s32.totalorder %s55, %s57
      %p61 = scmp.eq.s32.totalorder %s21, 0
      %p62 = por %p60, %p61
      %p63 = scmp.ne.s32.totalorder %s55, %s57
      %p64 = scmp.eq.s32.totalorder %s26, 1
      %p65 = por %p63, %p64
      %p66 = scmp.ne.s32.totalorder %s57, %s58
      %p67 = scmp.eq.s32.totalorder %s26, 0
      %p68 = por %p66, %p67
      %p69 = scmp.ne.s32.totalorder %s57, %s58
      %p70 = scmp.eq.s32.totalorder %s27, 1
      %p71 = por %p69, %p70
      %p73 = scmp.ne.s32.totalorder %s58, %s72
      %p74 = scmp.eq.s32.totalorder %s27, 0
      %p75 = por %p73, %p74
      %s77 = sadd.s32 %s76, 1
      %p80 = scmp.eq.s32.totalorder %s21, 1
      %p81 = scmp.ne.s32.totalorder %s76, %s78
      %p82 = scmp.eq.s32.totalorder %s21, 0
      %p83 = por %p81, %p82
      %p84 = scmp.ne.s32.totalorder %s76, %s78
      %p85 = scmp.eq.s32.totalorder %s26, 1
      %p86 = por %p84, %p85
      %p87 = scmp.ne.s32.totalorder %s78, %s79
      %p88 = scmp.eq.s32.totalorder %s26, 0
      %p89 = por %p87, %p88
      %p90 = scmp.ne.s32.totalorder %s78, %s79
      %p91 = scmp.eq.s32.totalorder %s27, 1
      %p92 = por %p90, %p91
      %p94 = scmp.ne.s32.totalorder %s79, %s93
      %p95 = scmp.eq.s32.totalorder %s27, 0
      %p96 = por %p94, %p95
      %s98 = sadd.s32 %s97, 1
      %p101 = scmp.eq.s32.totalorder %s21, 1
      %p102 = scmp.ne.s32.totalorder %s97, %s99
      %p103 = scmp.eq.s32.totalorder %s21, 0
      %p104 = por %p102, %p103
      %p105 = scmp.ne.s32.totalorder %s97, %s99
      %p106 = scmp.eq.s32.totalorder %s26, 1
      %p107 = por %p105, %p106
      %p108 = scmp.ne.s32.totalorder %s99, %s100
      %p109 = scmp.eq.s32.totalorder %s26, 0
      %p110 = por %p108, %p109
      %p111 = scmp.ne.s32.totalorder %s99, %s100
      %p112 = scmp.eq.s32.totalorder %s27, 1
      %p113 = por %p111, %p112
      %p115 = scmp.ne.s32.totalorder %s100, %s114
      %p116 = scmp.eq.s32.totalorder %s27, 0
      %p117 = por %p115, %p116
      %s119 = sadd.s32 %s118, 1
      %p122 = scmp.eq.s32.totalorder %s21, 1
      %p123 = scmp.ne.s32.totalorder %s118, %s120
      %p124 = scmp.eq.s32.totalorder %s21, 0
      %p125 = por %p123, %p124
      %p126 = scmp.ne.s32.totalorder %s118, %s120
      %p127 = scmp.eq.s32.totalorder %s26, 1
      %p128 = por %p126, %p127
      %p129 = scmp.ne.s32.totalorder %s120, %s121
      %p130 = scmp.eq.s32.totalorder %s26, 0
      %p131 = por %p129, %p130
      %p132 = scmp.ne.s32.totalorder %s120, %s121
      %p133 = scmp.eq.s32.totalorder %s27, 1
      %p134 = por %p132, %p133
      %p136 = scmp.ne.s32.totalorder %s121, %s135
      %p137 = scmp.eq.s32.totalorder %s27, 0
      %p138 = por %p136, %p137
      %s140 = sadd.s32 %s139, 1
      %p143 = scmp.eq.s32.totalorder %s21, 1
      %p144 = scmp.ne.s32.totalorder %s139, %s141
      %p145 = scmp.eq.s32.totalorder %s21, 0
      %p146 = por %p144, %p145
      %p147 = scmp.ne.s32.totalorder %s139, %s141
      %p148 = scmp.eq.s32.totalorder %s26, 1
      %p149 = por %p147, %p148
      %p150 = scmp.ne.s32.totalorder %s141, %s142
      %p151 = scmp.eq.s32.totalorder %s26, 0
      %p152 = por %p150, %p151
      %p153 = scmp.ne.s32.totalorder %s141, %s142
      %p154 = scmp.eq.s32.totalorder %s27, 1
      %p155 = por %p153, %p154
      %p157 = scmp.ne.s32.totalorder %s142, %s156
      %p158 = scmp.eq.s32.totalorder %s27, 0
      %p159 = por %p157, %p158
      %s161 = sadd.s32 %s160, 1
      %p164 = scmp.eq.s32.totalorder %s21, 1
      %p165 = scmp.ne.s32.totalorder %s160, %s162
      %p166 = scmp.eq.s32.totalorder %s21, 0
      %p167 = por %p165, %p166
      %p168 = scmp.ne.s32.totalorder %s160, %s162
      %p169 = scmp.eq.s32.totalorder %s26, 1
      %p170 = por %p168, %p169
      %p171 = scmp.ne.s32.totalorder %s162, %s163
      %p172 = scmp.eq.s32.totalorder %s26, 0
      %p173 = por %p171, %p172
      %p174 = scmp.ne.s32.totalorder %s162, %s163
      %p175 = scmp.eq.s32.totalorder %s27, 1
      %p176 = por %p174, %p175
      %p178 = scmp.ne.s32.totalorder %s163, %s177
      %p179 = scmp.eq.s32.totalorder %s27, 0
      %p180 = por %p178, %p179
      %s182 = sadd.s32 %s181, 1
      %p185 = scmp.eq.s32.totalorder %s21, 1
      %p186 = scmp.ne.s32.totalorder %s181, %s183
      %p187 = scmp.eq.s32.totalorder %s21, 0
      %p188 = por %p186, %p187
      %p189 = scmp.ne.s32.totalorder %s181, %s183
      %p190 = scmp.eq.s32.totalorder %s26, 1
      %p191 = por %p189, %p190
      %p192 = scmp.ne.s32.totalorder %s183, %s184
      %p193 = scmp.eq.s32.totalorder %s26, 0
      %p194 = por %p192, %p193
      %p195 = scmp.ne.s32.totalorder %s183, %s184
      %p196 = scmp.eq.s32.totalorder %s27, 1
      %p197 = por %p195, %p196
      %p199 = scmp.ne.s32.totalorder %s184, %s198
      %p200 = scmp.eq.s32.totalorder %s27, 0
      %p201 = por %p199, %p200
      %s203 = sadd.s32 %s202, 1
      %p206 = scmp.eq.s32.totalorder %s21, 1
      %p207 = scmp.ne.s32.totalorder %s202, %s204
      %p208 = scmp.eq.s32.totalorder %s21, 0
      %p209 = por %p207, %p208
      %p210 = scmp.ne.s32.totalorder %s202, %s204
      %p211 = scmp.eq.s32.totalorder %s26, 1
      %p212 = por %p210, %p211
      %p213 = scmp.ne.s32.totalorder %s204, %s205
      %p214 = scmp.eq.s32.totalorder %s26, 0
      %p215 = por %p213, %p214
      %p216 = scmp.ne.s32.totalorder %s204, %s205
      %p217 = scmp.eq.s32.totalorder %s27, 1
      %p218 = por %p216, %p217
      %p220 = scmp.ne.s32.totalorder %s205, %s219
      %p221 = scmp.eq.s32.totalorder %s27, 0
      %p222 = por %p220, %p221
      %s224 = sadd.s32 %s223, 1
      %p227 = scmp.eq.s32.totalorder %s21, 1
      %p228 = scmp.ne.s32.totalorder %s223, %s225
      %p229 = scmp.eq.s32.totalorder %s21, 0
      %p230 = por %p228, %p229
      %p231 = scmp.ne.s32.totalorder %s223, %s225
      %p232 = scmp.eq.s32.totalorder %s26, 1
      %p233 = por %p231, %p232
      %p234 = scmp.ne.s32.totalorder %s225, %s226
      %p235 = scmp.eq.s32.totalorder %s26, 0
      %p236 = por %p234, %p235
      %p237 = scmp.ne.s32.totalorder %s225, %s226
      %p238 = scmp.eq.s32.totalorder %s27, 1
      %p239 = por %p237, %p238
      %p241 = scmp.ne.s32.totalorder %s226, %s240
      %p242 = scmp.eq.s32.totalorder %s27, 0
      %p243 = por %p241, %p242
      %s245 = sadd.s32 %s244, 1
      %p248 = scmp.eq.s32.totalorder %s21, 1
      %p249 = scmp.ne.s32.totalorder %s244, %s246
      %p250 = scmp.eq.s32.totalorder %s21, 0
      %p251 = por %p249, %p250
      %p252 = scmp.ne.s32.totalorder %s244, %s246
      %p253 = scmp.eq.s32.totalorder %s26, 1
      %p254 = por %p252, %p253
      %p255 = scmp.ne.s32.totalorder %s246, %s247
      %p256 = scmp.eq.s32.totalorder %s26, 0
      %p257 = por %p255, %p256
      %p258 = scmp.ne.s32.totalorder %s246, %s247
      %p259 = scmp.eq.s32.totalorder %s27, 1
      %p260 = por %p258, %p259
      %p262 = scmp.ne.s32.totalorder %s247, %s261
      %p263 = scmp.eq.s32.totalorder %s27, 0
      %p264 = por %p262, %p263
      %s266 = sadd.s32 %s265, 1
      %p269 = scmp.eq.s32.totalorder %s21, 1
      %p270 = scmp.ne.s32.totalorder %s265, %s267
      %p271 = scmp.eq.s32.totalorder %s21, 0
      %p272 = por %p270, %p271
      %p273 = scmp.ne.s32.totalorder %s265, %s267
      %p274 = scmp.eq.s32.totalorder %s26, 1
      %p275 = por %p273, %p274
      %p276 = scmp.ne.s32.totalorder %s267, %s268
      %p277 = scmp.eq.s32.totalorder %s26, 0
      %p278 = por %p276, %p277
      %p279 = scmp.ne.s32.totalorder %s267, %s268
      %p280 = scmp.eq.s32.totalorder %s27, 1
      %p281 = por %p279, %p280
      %p283 = scmp.ne.s32.totalorder %s268, %s282
      %p284 = scmp.eq.s32.totalorder %s27, 0
      %p285 = por %p283, %p284
      %s286 = ssub.s32 %s21, %s28
      %p287 = scmp.eq.s32.totalorder %s286, 0
      %s289 = sadd.s32 %s288, 1
      %s290 = scalar_select %p287, %s288, %s289
      %p293 = pneg %p287
      %p294 = scmp.eq.s32.totalorder %s21, 1
      %p295 = por %p293, %p294
      %p296 = scmp.ne.s32.totalorder %s288, %s291
      %p297 = scmp.eq.s32.totalorder %s21, 0
      %p298 = por %p296, %p297
      %p299 = scmp.ne.s32.totalorder %s288, %s291
      %p300 = scmp.eq.s32.totalorder %s26, 1
      %p301 = por %p299, %p300
      %p302 = scmp.ne.s32.totalorder %s291, %s292
      %p303 = scmp.eq.s32.totalorder %s26, 0
      %p304 = por %p302, %p303
      %p305 = scmp.ne.s32.totalorder %s291, %s292
      %p306 = scmp.eq.s32.totalorder %s27, 1
      %p307 = por %p305, %p306
      %p309 = scmp.ne.s32.totalorder %s292, %s308
      %p310 = scmp.eq.s32.totalorder %s27, 0
      %p311 = por %p309, %p310
      %p312 = scmp.le.s32.totalorder 1, %s21
      %p313 = scmp.lt.s32.totalorder %s21, 3
      %p314 = pnand %p312, %p313
      %p315 = pneg %p314
      // Predicated region
      $region9: #{encoder_forward.1} parent=5 // pred_check
        _
      $region10: #{encoder_forward.1} parent=5 // pred_check_branch
        %317 = sbr.rel (%p314) target = $region12
      $region11: #{encoder_forward.1} parent=5 // pred_region
        %s318 = ssub.s32 %s21, 1
        // Predicated region
        $region13: #{encoder_forward.1} parent=11 // pred_check
          %p319 = pneg %p68
        $region14: #{encoder_forward.1} parent=11 // pred_check_branch
          %321 = sbr.rel (%p319) target = $region16
        $region15: #{encoder_forward.1} parent=11 // pred_region
          _
        $region16: #{encoder_forward.1} parent=11 // pred_fallthru
          _
        // Predicated region
        $region17: #{encoder_forward.1} parent=11 // pred_check
          %p322 = pneg %p89
        $region18: #{encoder_forward.1} parent=11 // pred_check_branch
          %324 = sbr.rel (%p322) target = $region20
        $region19: #{encoder_forward.1} parent=11 // pred_region
          _
        $region20: #{encoder_forward.1} parent=11 // pred_fallthru
          _
        // Predicated region
        $region21: #{encoder_forward.1} parent=11 // pred_check
          %p325 = pneg %p110
        $region22: #{encoder_forward.1} parent=11 // pred_check_branch
          %327 = sbr.rel (%p325) target = $region24
        $region23: #{encoder_forward.1} parent=11 // pred_region
          _
        $region24: #{encoder_forward.1} parent=11 // pred_fallthru
          _
        // Predicated region
        $region25: #{encoder_forward.1} parent=11 // pred_check
          %p328 = pneg %p131
        $region26: #{encoder_forward.1} parent=11 // pred_check_branch
          %330 = sbr.rel (%p328) target = $region28
        $region27: #{encoder_forward.1} parent=11 // pred_region
          _
        $region28: #{encoder_forward.1} parent=11 // pred_fallthru
          _
        // Predicated region
        $region29: #{encoder_forward.1} parent=11 // pred_check
          %p331 = pneg %p152
        $region30: #{encoder_forward.1} parent=11 // pred_check_branch
          %333 = sbr.rel (%p331) target = $region32
        $region31: #{encoder_forward.1} parent=11 // pred_region
          _
        $region32: #{encoder_forward.1} parent=11 // pred_fallthru
          _
        // Predicated region
        $region33: #{encoder_forward.1} parent=11 // pred_check
          %p334 = pneg %p173
        $region34: #{encoder_forward.1} parent=11 // pred_check_branch
          %336 = sbr.rel (%p334) target = $region36
        $region35: #{encoder_forward.1} parent=11 // pred_region
          _
        $region36: #{encoder_forward.1} parent=11 // pred_fallthru
          _
        // Predicated region
        $region37: #{encoder_forward.1} parent=11 // pred_check
          %p337 = pneg %p194
        $region38: #{encoder_forward.1} parent=11 // pred_check_branch
          %339 = sbr.rel (%p337) target = $region40
        $region39: #{encoder_forward.1} parent=11 // pred_region
          _
        $region40: #{encoder_forward.1} parent=11 // pred_fallthru
          _
        // Predicated region
        $region41: #{encoder_forward.1} parent=11 // pred_check
          %p340 = pneg %p215
        $region42: #{encoder_forward.1} parent=11 // pred_check_branch
          %342 = sbr.rel (%p340) target = $region44
        $region43: #{encoder_forward.1} parent=11 // pred_region
          _
        $region44: #{encoder_forward.1} parent=11 // pred_fallthru
          _
        // Predicated region
        $region45: #{encoder_forward.1} parent=11 // pred_check
          %p343 = pneg %p236
        $region46: #{encoder_forward.1} parent=11 // pred_check_branch
          %345 = sbr.rel (%p343) target = $region48
        $region47: #{encoder_forward.1} parent=11 // pred_region
          _
        $region48: #{encoder_forward.1} parent=11 // pred_fallthru
          _
        // Predicated region
        $region49: #{encoder_forward.1} parent=11 // pred_check
          %p346 = pneg %p257
        $region50: #{encoder_forward.1} parent=11 // pred_check_branch
          %348 = sbr.rel (%p346) target = $region52
        $region51: #{encoder_forward.1} parent=11 // pred_region
          _
        $region52: #{encoder_forward.1} parent=11 // pred_fallthru
          _
        // Predicated region
        $region53: #{encoder_forward.1} parent=11 // pred_check
          %p349 = pneg %p278
        $region54: #{encoder_forward.1} parent=11 // pred_check_branch
          %351 = sbr.rel (%p349) target = $region56
        $region55: #{encoder_forward.1} parent=11 // pred_region
          _
        $region56: #{encoder_forward.1} parent=11 // pred_fallthru
          _
      $region12: #{encoder_forward.1} parent=5 // pred_fallthru
        _
      %p352 = scmp.lt.s32.totalorder %s21, 2
      // Predicated region
      $region57: #{encoder_forward.1} parent=5 // pred_check
        %p353 = pneg %p352
      $region58: #{encoder_forward.1} parent=5 // pred_check_branch
        %355 = sbr.rel (%p353) target = $region60
      $region59: #{encoder_forward.1} parent=5 // pred_region
        // Predicated region
        $region61: #{encoder_forward.1} parent=59 // pred_check
          %p356 = pneg %p41
        $region62: #{encoder_forward.1} parent=59 // pred_check_branch
          %358 = sbr.rel (%p356) target = $region64
        $region63: #{encoder_forward.1} parent=59 // pred_region
          %s359 = smul.u32 16, %s21
          %p360 = scmp.lt.s32.totalorder %s359, 31
          %s361 = scalar_select %p360, %s359, 31
          %s362 = smul.addr %s361, 4
          %s363 = smul.addr %s362, 4
          %s364 = scalar_lea.vmem %s0, %s363
          %s365 = smul.u32 16, %s21
        $region64: #{encoder_forward.1} parent=59 // pred_fallthru
          _
      $region60: #{encoder_forward.1} parent=5 // pred_fallthru
        _
      %p366 = scmp.le.s32.totalorder 1, %s21
      %p367 = scmp.lt.s32.totalorder %s21, 3
      %p368 = pnand %p366, %p367
      %p369 = pneg %p368
      // Predicated region
      $region65: #{encoder_forward.1} parent=5 // pred_check
        _
      $region66: #{encoder_forward.1} parent=5 // pred_check_branch
        %371 = sbr.rel (%p368) target = $region68
      $region67: #{encoder_forward.1} parent=5 // pred_region
        %s372 = ssub.s32 %s21, 1
        %s373 = smul.u32 16, %s26
        %p374 = scmp.lt.s32.totalorder %s373, 31
        %s375 = scalar_select %p374, %s373, 31
        %s376 = smul.addr %s375, 4
        %s377 = smul.addr %s376, 4
        %s378 = scalar_lea.vmem %s0, %s377
        %p379 = pneg %p47
        %p380 = pneg %p44
        %p381 = pneg %p68
        %p382 = pneg %p65
        %p383 = pneg %p89
        %p384 = pneg %p86
        %p385 = pneg %p110
        %p386 = pneg %p107
        %p387 = pneg %p131
        %p388 = pneg %p128
        %p389 = pneg %p152
        %p390 = pneg %p149
        %p391 = pneg %p173
        %p392 = pneg %p170
        %p393 = pneg %p194
        %p394 = pneg %p191
        %p395 = pneg %p215
        %p396 = pneg %p212
        %p397 = pneg %p236
        %p398 = pneg %p233
        %p399 = pneg %p257
        %p400 = pneg %p254
        %p401 = pneg %p278
        %p402 = pneg %p275
        %p403 = pneg %p304
        %p404 = pneg %p301
        %s405 = sand.u32 %s291, 1
        %s406 = scalar_lea.sflag [#allocation3], %s405
        %s407 = sand.u32 %s291, 1
        %s408 = smul.addr %s407, 8
        %s409 = scalar_lea.vmem [#allocation2], %s408
        %s410 = smul.u32 16, %s26
        %p411 = scmp.lt.s32.totalorder %s410, 31
        %s412 = scalar_select %p411, %s410, 31
        %s413 = smul.addr %s412, 4
        %s414 = smul.addr %s413, 4
        %s415 = scalar_lea.vmem %s0, %s414
        %s416 = smul.u32 16, %s26
        %v418 = vld [vmem:[%s415] sm:$0xff]
        %v419 = vld [vmem:[%s415 + $0x8] sm:$0xff]
        %v420 = vld [vmem:[%s415 + $0x10] sm:$0xff]
        %v421 = vld [vmem:[%s415 + $0x18] sm:$0xff]
        %v422 = vld [vmem:[%s415 + $0x20] sm:$0xff]
        %v423 = vld [vmem:[%s415 + $0x28] sm:$0xff]
        %v424 = vld [vmem:[%s415 + $0x30] sm:$0xff]
        %v425 = vld [vmem:[%s415 + $0x38] sm:$0xff]
        %v426 = vld [vmem:[%s415 + $0x40] sm:$0xff]
        %v427 = vld [vmem:[%s415 + $0x48] sm:$0xff]
        %v428 = vld [vmem:[%s415 + $0x50] sm:$0xff]
        %v429 = vld [vmem:[%s415 + $0x58] sm:$0xff]
        %v430 = vld [vmem:[%s415 + $0x60] sm:$0xff]
        %v431 = vld [vmem:[%s415 + $0x68] sm:$0xff]
        %v432 = vld [vmem:[%s415 + $0x70] sm:$0xff]
        %v433 = vld [vmem:[%s415 + $0x78] sm:$0xff]
        %v434 = vld [vmem:[%s415 + $0x80] sm:$0xff]
        %v435 = vld [vmem:[%s415 + $0x88] sm:$0xff]
        %v436 = vld [vmem:[%s415 + $0x90] sm:$0xff]
        %v437 = vld [vmem:[%s415 + $0x98] sm:$0xff]
        %v438 = vld [vmem:[%s415 + $0xa0] sm:$0xff]
        %v439 = vld [vmem:[%s415 + $0xa8] sm:$0xff]
        %v440 = vld [vmem:[%s415 + $0xb0] sm:$0xff]
        %v441 = vld [vmem:[%s415 + $0xb8] sm:$0xff]
        %v442 = vld [vmem:[%s415 + $0xc0] sm:$0xff]
        %v443 = vld [vmem:[%s415 + $0xc8] sm:$0xff]
        %v444 = vld [vmem:[%s415 + $0xd0] sm:$0xff]
        %v445 = vld [vmem:[%s415 + $0xd8] sm:$0xff]
        %v446 = vld [vmem:[%s415 + $0xe0] sm:$0xff]
        %v447 = vld [vmem:[%s415 + $0xe8] sm:$0xff]
        %v448 = vld [vmem:[%s415 + $0xf0] sm:$0xff]
        %v449 = vld [vmem:[%s415 + $0xf8] sm:$0xff]
        %v450 = vld [vmem:[%s1] sm:$0xf]
        %v451 = vld [vmem:[%s1 + $0x4] sm:$0xf]
        %v452 = vld [vmem:[%s1 + $0x8] sm:$0xf]
        %v453 = vld [vmem:[%s1 + $0xc] sm:$0xf]
        %v454 = vld [vmem:[%s1 + $0x10] sm:$0xf]
        %v455 = vld [vmem:[%s1 + $0x14] sm:$0xf]
        %v456 = vld [vmem:[%s1 + $0x18] sm:$0xf]
        %v457 = vld [vmem:[%s1 + $0x1c] sm:$0xf]
        %v458 = vld [vmem:[%s1 + $0x20] sm:$0xf]
        %v459 = vld [vmem:[%s1 + $0x24] sm:$0xf]
        %v460 = vld [vmem:[%s1 + $0x28] sm:$0xf]
        %v461 = vld [vmem:[%s1 + $0x2c] sm:$0xf]
        %v462 = vld [vmem:[%s1 + $0x30] sm:$0xf]
        %v463 = vld [vmem:[%s1 + $0x34] sm:$0xf]
        %v464 = vld [vmem:[%s1 + $0x38] sm:$0xf]
        %v465 = vld [vmem:[%s1 + $0x3c] sm:$0xf]
        %v466 = vld [vmem:[%s1 + $0x40] sm:$0xf]
        %v467 = vld [vmem:[%s1 + $0x44] sm:$0xf]
        %v468 = vld [vmem:[%s1 + $0x48] sm:$0xf]
        %v469 = vld [vmem:[%s1 + $0x4c] sm:$0xf]
        %v470 = vld [vmem:[%s1 + $0x50] sm:$0xf]
        %v471 = vld [vmem:[%s1 + $0x54] sm:$0xf]
        %v472 = vld [vmem:[%s1 + $0x58] sm:$0xf]
        %v473 = vld [vmem:[%s1 + $0x5c] sm:$0xf]
        %v474 = vld [vmem:[%s1 + $0x60] sm:$0xf]
        %v475 = vld [vmem:[%s1 + $0x64] sm:$0xf]
        %v476 = vld [vmem:[%s1 + $0x68] sm:$0xf]
        %v477 = vld [vmem:[%s1 + $0x6c] sm:$0xf]
        %v478 = vld [vmem:[%s1 + $0x70] sm:$0xf]
        %v479 = vld [vmem:[%s1 + $0x74] sm:$0xf]
        %v480 = vld [vmem:[%s1 + $0x78] sm:$0xf]
        %v481 = vld [vmem:[%s1 + $0x7c] sm:$0xf]
        %v482 = vld [vmem:[%s1 + $0x80] sm:$0xf]
        %v483 = vld [vmem:[%s1 + $0x84] sm:$0xf]
        %v484 = vld [vmem:[%s1 + $0x88] sm:$0xf]
        %v485 = vld [vmem:[%s1 + $0x8c] sm:$0xf]
        %v486 = vld [vmem:[%s1 + $0x90] sm:$0xf]
        %v487 = vld [vmem:[%s1 + $0x94] sm:$0xf]
        %v488 = vld [vmem:[%s1 + $0x98] sm:$0xf]
        %v489 = vld [vmem:[%s1 + $0x9c] sm:$0xf]
        %v490 = vld [vmem:[%s1 + $0xa0] sm:$0xf]
        %v491 = vld [vmem:[%s1 + $0xa4] sm:$0xf]
        %v492 = vld [vmem:[%s1 + $0xa8] sm:$0xf]
        %v493 = vld [vmem:[%s1 + $0xac] sm:$0xf]
        %v494 = vld [vmem:[%s1 + $0xb0] sm:$0xf]
        %v495 = vld [vmem:[%s1 + $0xb4] sm:$0xf]
        %v496 = vld [vmem:[%s1 + $0xb8] sm:$0xf]
        %v497 = vld [vmem:[%s1 + $0xbc] sm:$0xf]
        %v498 = vld [vmem:[%s1 + $0xc0] sm:$0xf]
        %v499 = vld [vmem:[%s1 + $0xc4] sm:$0xf]
        %v500 = vld [vmem:[%s1 + $0xc8] sm:$0xf]
        %v501 = vld [vmem:[%s1 + $0xcc] sm:$0xf]
        %v502 = vld [vmem:[%s1 + $0xd0] sm:$0xf]
        %v503 = vld [vmem:[%s1 + $0xd4] sm:$0xf]
        %v504 = vld [vmem:[%s1 + $0xd8] sm:$0xf]
        %v505 = vld [vmem:[%s1 + $0xdc] sm:$0xf]
        %v506 = vld [vmem:[%s1 + $0xe0] sm:$0xf]
        %v507 = vld [vmem:[%s1 + $0xe4] sm:$0xf]
        %v508 = vld [vmem:[%s1 + $0xe8] sm:$0xf]
        %v509 = vld [vmem:[%s1 + $0xec] sm:$0xf]
        %v510 = vld [vmem:[%s1 + $0xf0] sm:$0xf]
        %v511 = vld [vmem:[%s1 + $0xf4] sm:$0xf]
        %v512 = vld [vmem:[%s1 + $0xf8] sm:$0xf]
        %v513 = vld [vmem:[%s1 + $0xfc] sm:$0xf]
        %v514 = vld [vmem:[%s2] sm:$0x1]
        %v516 = vperm.slane %v514, 0
        %v550 = vunpack.c.l.b16 %v418
        %v551 = vunpack.c.h.b16 %v418
        %v552 = vunpack.c.l.b16 %v419
        %v553 = vunpack.c.h.b16 %v419
        %v554 = vunpack.c.l.b16 %v420
        %v555 = vunpack.c.h.b16 %v420
        %v556 = vunpack.c.l.b16 %v421
        %v557 = vunpack.c.h.b16 %v421
        %v558 = vunpack.c.l.b16 %v422
        %v559 = vunpack.c.h.b16 %v422
        %v560 = vunpack.c.l.b16 %v423
        %v561 = vunpack.c.h.b16 %v423
        %v562 = vunpack.c.l.b16 %v424
        %v563 = vunpack.c.h.b16 %v424
        %v564 = vunpack.c.l.b16 %v425
        %v565 = vunpack.c.h.b16 %v425
        %v566 = vunpack.c.l.b16 %v426
        %v567 = vunpack.c.h.b16 %v426
        %v568 = vunpack.c.l.b16 %v427
        %v569 = vunpack.c.h.b16 %v427
        %v570 = vunpack.c.l.b16 %v428
        %v571 = vunpack.c.h.b16 %v428
        %v572 = vunpack.c.l.b16 %v429
        %v573 = vunpack.c.h.b16 %v429
        %v574 = vunpack.c.l.b16 %v430
        %v575 = vunpack.c.h.b16 %v430
        %v576 = vunpack.c.l.b16 %v431
        %v577 = vunpack.c.h.b16 %v431
        %v578 = vunpack.c.l.b16 %v432
        %v579 = vunpack.c.h.b16 %v432
        %v580 = vunpack.c.l.b16 %v433
        %v581 = vunpack.c.h.b16 %v433
        %v582 = vunpack.c.l.b16 %v434
        %v583 = vunpack.c.h.b16 %v434
        %v584 = vunpack.c.l.b16 %v435
        %v585 = vunpack.c.h.b16 %v435
        %v586 = vunpack.c.l.b16 %v436
        %v587 = vunpack.c.h.b16 %v436
        %v588 = vunpack.c.l.b16 %v437
        %v589 = vunpack.c.h.b16 %v437
        %v590 = vunpack.c.l.b16 %v438
        %v591 = vunpack.c.h.b16 %v438
        %v592 = vunpack.c.l.b16 %v439
        %v593 = vunpack.c.h.b16 %v439
        %v594 = vunpack.c.l.b16 %v440
        %v595 = vunpack.c.h.b16 %v440
        %v596 = vunpack.c.l.b16 %v441
        %v597 = vunpack.c.h.b16 %v441
        %v598 = vunpack.c.l.b16 %v442
        %v599 = vunpack.c.h.b16 %v442
        %v600 = vunpack.c.l.b16 %v443
        %v601 = vunpack.c.h.b16 %v443
        %v602 = vunpack.c.l.b16 %v444
        %v603 = vunpack.c.h.b16 %v444
        %v604 = vunpack.c.l.b16 %v445
        %v605 = vunpack.c.h.b16 %v445
        %v606 = vunpack.c.l.b16 %v446
        %v607 = vunpack.c.h.b16 %v446
        %v608 = vunpack.c.l.b16 %v447
        %v609 = vunpack.c.h.b16 %v447
        %v610 = vunpack.c.l.b16 %v448
        %v611 = vunpack.c.h.b16 %v448
        %v612 = vunpack.c.l.b16 %v449
        %v613 = vunpack.c.h.b16 %v449
        %v614 = vpack.c.b16 %v554, %v550
        %v615 = vpack.c.b16 %v555, %v551
        %v616 = vpack.c.b16 %v556, %v552
        %v617 = vpack.c.b16 %v557, %v553
        %v618 = vpack.c.b16 %v562, %v558
        %v619 = vpack.c.b16 %v563, %v559
        %v620 = vpack.c.b16 %v564, %v560
        %v621 = vpack.c.b16 %v565, %v561
        %v622 = vpack.c.b16 %v570, %v566
        %v623 = vpack.c.b16 %v571, %v567
        %v624 = vpack.c.b16 %v572, %v568
        %v625 = vpack.c.b16 %v573, %v569
        %v626 = vpack.c.b16 %v578, %v574
        %v627 = vpack.c.b16 %v579, %v575
        %v628 = vpack.c.b16 %v580, %v576
        %v629 = vpack.c.b16 %v581, %v577
        %v630 = vpack.c.b16 %v586, %v582
        %v631 = vpack.c.b16 %v587, %v583
        %v632 = vpack.c.b16 %v588, %v584
        %v633 = vpack.c.b16 %v589, %v585
        %v634 = vpack.c.b16 %v594, %v590
        %v635 = vpack.c.b16 %v595, %v591
        %v636 = vpack.c.b16 %v596, %v592
        %v637 = vpack.c.b16 %v597, %v593
        %v638 = vpack.c.b16 %v602, %v598
        %v639 = vpack.c.b16 %v603, %v599
        %v640 = vpack.c.b16 %v604, %v600
        %v641 = vpack.c.b16 %v605, %v601
        %v642 = vpack.c.b16 %v610, %v606
        %v643 = vpack.c.b16 %v611, %v607
        %v644 = vpack.c.b16 %v612, %v608
        %v645 = vpack.c.b16 %v613, %v609
        %v742 = vunpack.c.l.b16 %v450
        %v743 = vunpack.c.l.b16 %v451
        %v744 = vunpack.c.l.b16 %v452
        %v745 = vunpack.c.l.b16 %v453
        %v746 = vunpack.c.l.b16 %v454
        %v747 = vunpack.c.l.b16 %v455
        %v748 = vunpack.c.l.b16 %v456
        %v749 = vunpack.c.l.b16 %v457
        %v750 = vunpack.c.l.b16 %v458
        %v751 = vunpack.c.l.b16 %v459
        %v752 = vunpack.c.l.b16 %v460
        %v753 = vunpack.c.l.b16 %v461
        %v754 = vunpack.c.l.b16 %v462
        %v755 = vunpack.c.l.b16 %v463
        %v756 = vunpack.c.l.b16 %v464
        %v757 = vunpack.c.l.b16 %v465
        %v758 = vunpack.c.l.b16 %v466
        %v759 = vunpack.c.l.b16 %v467
        %v760 = vunpack.c.l.b16 %v468
        %v761 = vunpack.c.l.b16 %v469
        %v762 = vunpack.c.l.b16 %v470
        %v763 = vunpack.c.l.b16 %v471
        %v764 = vunpack.c.l.b16 %v472
        %v765 = vunpack.c.l.b16 %v473
        %v766 = vunpack.c.l.b16 %v474
        %v767 = vunpack.c.l.b16 %v475
        %v768 = vunpack.c.l.b16 %v476
        %v769 = vunpack.c.l.b16 %v477
        %v770 = vunpack.c.l.b16 %v478
        %v771 = vunpack.c.l.b16 %v479
        %v772 = vunpack.c.l.b16 %v480
        %v773 = vunpack.c.l.b16 %v481
        %v774 = vunpack.c.l.b16 %v482
        %v775 = vunpack.c.l.b16 %v483
        %v776 = vunpack.c.l.b16 %v484
        %v777 = vunpack.c.l.b16 %v485
        %v778 = vunpack.c.l.b16 %v486
        %v779 = vunpack.c.l.b16 %v487
        %v780 = vunpack.c.l.b16 %v488
        %v781 = vunpack.c.l.b16 %v489
        %v782 = vunpack.c.l.b16 %v490
        %v783 = vunpack.c.l.b16 %v491
        %v784 = vunpack.c.l.b16 %v492
        %v785 = vunpack.c.l.b16 %v493
        %v786 = vunpack.c.l.b16 %v494
        %v787 = vunpack.c.l.b16 %v495
        %v788 = vunpack.c.l.b16 %v496
        %v789 = vunpack.c.l.b16 %v497
        %v790 = vunpack.c.l.b16 %v498
        %v791 = vunpack.c.l.b16 %v499
        %v792 = vunpack.c.l.b16 %v500
        %v793 = vunpack.c.l.b16 %v501
        %v794 = vunpack.c.l.b16 %v502
        %v795 = vunpack.c.l.b16 %v503
        %v796 = vunpack.c.l.b16 %v504
        %v797 = vunpack.c.l.b16 %v505
        %v798 = vunpack.c.l.b16 %v506
        %v799 = vunpack.c.l.b16 %v507
        %v800 = vunpack.c.l.b16 %v508
        %v801 = vunpack.c.l.b16 %v509
        %v802 = vunpack.c.l.b16 %v510
        %v803 = vunpack.c.l.b16 %v511
        %v804 = vunpack.c.l.b16 %v512
        %v805 = vunpack.c.l.b16 %v513
        %v806 = vpack.c.b16 %v743, %v742
        %v807 = vpack.c.b16 %v745, %v744
        %v808 = vpack.c.b16 %v747, %v746
        %v809 = vpack.c.b16 %v749, %v748
        %v810 = vpack.c.b16 %v751, %v750
        %v811 = vpack.c.b16 %v753, %v752
        %v812 = vpack.c.b16 %v755, %v754
        %v813 = vpack.c.b16 %v757, %v756
        %v814 = vpack.c.b16 %v759, %v758
        %v815 = vpack.c.b16 %v761, %v760
        %v816 = vpack.c.b16 %v763, %v762
        %v817 = vpack.c.b16 %v765, %v764
        %v818 = vpack.c.b16 %v767, %v766
        %v819 = vpack.c.b16 %v769, %v768
        %v820 = vpack.c.b16 %v771, %v770
        %v821 = vpack.c.b16 %v773, %v772
        %v822 = vpack.c.b16 %v775, %v774
        %v823 = vpack.c.b16 %v777, %v776
        %v824 = vpack.c.b16 %v779, %v778
        %v825 = vpack.c.b16 %v781, %v780
        %v826 = vpack.c.b16 %v783, %v782
        %v827 = vpack.c.b16 %v785, %v784
        %v828 = vpack.c.b16 %v787, %v786
        %v829 = vpack.c.b16 %v789, %v788
        %v830 = vpack.c.b16 %v791, %v790
        %v831 = vpack.c.b16 %v793, %v792
        %v832 = vpack.c.b16 %v795, %v794
        %v833 = vpack.c.b16 %v797, %v796
        %v834 = vpack.c.b16 %v799, %v798
        %v835 = vpack.c.b16 %v801, %v800
        %v836 = vpack.c.b16 %v803, %v802
        %v837 = vpack.c.b16 %v805, %v804
        %870 = vmatpush.bf16.msra.mxu0 %v813
        %871 = vmatpush.bf16.msra.mxu0 %v812
        %872 = vmatpush.bf16.msra.mxu0 %v811
        %873 = vmatpush.bf16.msra.mxu0 %v810
        %874 = vmatpush.bf16.msra.mxu0 %v809
        %875 = vmatpush.bf16.msra.mxu0 %v808
        %876 = vmatpush.bf16.msra.mxu0 %v807
        %877 = vmatpush.bf16.msra.mxu0 %v806
        %878 = vmatmul.bf16.gmra.mxu0 %v614
        %v879 = vpop.f32.mrf.mxu0
        %v880 = vadd.f32 %v516, %v879
        %v881 = vpop.f32.mrf.mxu0
        %v882 = vadd.f32 %v516, %v881
        %883 = vmatmul.bf16.gmra.mxu0 %v618
        %v884 = vpop.f32.mrf.mxu0
        %v885 = vadd.f32 %v516, %v884
        %v886 = vpop.f32.mrf.mxu0
        %v887 = vadd.f32 %v516, %v886
        %888 = vmatmul.bf16.gmra.mxu0 %v622
        %v889 = vpop.f32.mrf.mxu0
        %v890 = vadd.f32 %v516, %v889
        %v891 = vpop.f32.mrf.mxu0
        %v892 = vadd.f32 %v516, %v891
        %893 = vmatmul.bf16.gmra.mxu0 %v626
        %v894 = vpop.f32.mrf.mxu0
        %v895 = vadd.f32 %v516, %v894
        %v896 = vpop.f32.mrf.mxu0
        %v897 = vadd.f32 %v516, %v896
        %898 = vmatmul.bf16.gmra.mxu0 %v630
        %v899 = vpop.f32.mrf.mxu0
        %v900 = vadd.f32 %v516, %v899
        %v901 = vpop.f32.mrf.mxu0
        %v902 = vadd.f32 %v516, %v901
        %903 = vmatmul.bf16.gmra.mxu0 %v634
        %v904 = vpop.f32.mrf.mxu0
        %v905 = vadd.f32 %v516, %v904
        %v906 = vpop.f32.mrf.mxu0
        %v907 = vadd.f32 %v516, %v906
        %908 = vmatmul.bf16.gmra.mxu0 %v638
        %v909 = vpop.f32.mrf.mxu0
        %v910 = vadd.f32 %v516, %v909
        %v911 = vpop.f32.mrf.mxu0
        %v912 = vadd.f32 %v516, %v911
        %913 = vmatmul.bf16.gmra.mxu0 %v642
        %v914 = vpop.f32.mrf.mxu0
        %v915 = vadd.f32 %v516, %v914
        %v916 = vpop.f32.mrf.mxu0
        %v917 = vadd.f32 %v516, %v916
        %918 = vdwg.mxu0
        %919 = vmatpush.bf16.msra.mxu0 %v821
        %920 = vmatpush.bf16.msra.mxu0 %v820
        %921 = vmatpush.bf16.msra.mxu0 %v819
        %922 = vmatpush.bf16.msra.mxu0 %v818
        %923 = vmatpush.bf16.msra.mxu0 %v817
        %924 = vmatpush.bf16.msra.mxu0 %v816
        %925 = vmatpush.bf16.msra.mxu0 %v815
        %926 = vmatpush.bf16.msra.mxu0 %v814
        %927 = vmatmul.bf16.gmra.mxu0 %v615
        %v928 = vpop.f32.mrf.mxu0
        %v929 = vadd.f32 %v880, %v928
        %v930 = vpop.f32.mrf.mxu0
        %v931 = vadd.f32 %v882, %v930
        %932 = vmatmul.bf16.gmra.mxu0 %v619
        %v933 = vpop.f32.mrf.mxu0
        %v934 = vadd.f32 %v885, %v933
        %v935 = vpop.f32.mrf.mxu0
        %v936 = vadd.f32 %v887, %v935
        %937 = vmatmul.bf16.gmra.mxu0 %v623
        %v938 = vpop.f32.mrf.mxu0
        %v939 = vadd.f32 %v890, %v938
        %v940 = vpop.f32.mrf.mxu0
        %v941 = vadd.f32 %v892, %v940
        %942 = vmatmul.bf16.gmra.mxu0 %v627
        %v943 = vpop.f32.mrf.mxu0
        %v944 = vadd.f32 %v895, %v943
        %v945 = vpop.f32.mrf.mxu0
        %v946 = vadd.f32 %v897, %v945
        %947 = vmatmul.bf16.gmra.mxu0 %v631
        %v948 = vpop.f32.mrf.mxu0
        %v949 = vadd.f32 %v900, %v948
        %v950 = vpop.f32.mrf.mxu0
        %v951 = vadd.f32 %v902, %v950
        %952 = vmatmul.bf16.gmra.mxu0 %v635
        %v953 = vpop.f32.mrf.mxu0
        %v954 = vadd.f32 %v905, %v953
        %v955 = vpop.f32.mrf.mxu0
        %v956 = vadd.f32 %v907, %v955
        %957 = vmatmul.bf16.gmra.mxu0 %v639
        %v958 = vpop.f32.mrf.mxu0
        %v959 = vadd.f32 %v910, %v958
        %v960 = vpop.f32.mrf.mxu0
        %v961 = vadd.f32 %v912, %v960
        %962 = vmatmul.bf16.gmra.mxu0 %v643
        %v963 = vpop.f32.mrf.mxu0
        %v964 = vadd.f32 %v915, %v963
        %v965 = vpop.f32.mrf.mxu0
        %v966 = vadd.f32 %v917, %v965
        %967 = vdwg.mxu0
        %968 = vmatpush.bf16.msra.mxu0 %v829
        %969 = vmatpush.bf16.msra.mxu0 %v828
        %970 = vmatpush.bf16.msra.mxu0 %v827
        %971 = vmatpush.bf16.msra.mxu0 %v826
        %972 = vmatpush.bf16.msra.mxu0 %v825
        %973 = vmatpush.bf16.msra.mxu0 %v824
        %974 = vmatpush.bf16.msra.mxu0 %v823
        %975 = vmatpush.bf16.msra.mxu0 %v822
        %976 = vmatmul.bf16.gmra.mxu0 %v616
        %v977 = vpop.f32.mrf.mxu0
        %v978 = vadd.f32 %v929, %v977
        %v979 = vpop.f32.mrf.mxu0
        %v980 = vadd.f32 %v931, %v979
        %981 = vmatmul.bf16.gmra.mxu0 %v620
        %v982 = vpop.f32.mrf.mxu0
        %v983 = vadd.f32 %v934, %v982
        %v984 = vpop.f32.mrf.mxu0
        %v985 = vadd.f32 %v936, %v984
        %986 = vmatmul.bf16.gmra.mxu0 %v624
        %v987 = vpop.f32.mrf.mxu0
        %v988 = vadd.f32 %v939, %v987
        %v989 = vpop.f32.mrf.mxu0
        %v990 = vadd.f32 %v941, %v989
        %991 = vmatmul.bf16.gmra.mxu0 %v628
        %v992 = vpop.f32.mrf.mxu0
        %v993 = vadd.f32 %v944, %v992
        %v994 = vpop.f32.mrf.mxu0
        %v995 = vadd.f32 %v946, %v994
        %996 = vmatmul.bf16.gmra.mxu0 %v632
        %v997 = vpop.f32.mrf.mxu0
        %v998 = vadd.f32 %v949, %v997
        %v999 = vpop.f32.mrf.mxu0
        %v1000 = vadd.f32 %v951, %v999
        %1001 = vmatmul.bf16.gmra.mxu0 %v636
        %v1002 = vpop.f32.mrf.mxu0
        %v1003 = vadd.f32 %v954, %v1002
        %v1004 = vpop.f32.mrf.mxu0
        %v1005 = vadd.f32 %v956, %v1004
        %1006 = vmatmul.bf16.gmra.mxu0 %v640
        %v1007 = vpop.f32.mrf.mxu0
        %v1008 = vadd.f32 %v959, %v1007
        %v1009 = vpop.f32.mrf.mxu0
        %v1010 = vadd.f32 %v961, %v1009
        %1011 = vmatmul.bf16.gmra.mxu0 %v644
        %v1012 = vpop.f32.mrf.mxu0
        %v1013 = vadd.f32 %v964, %v1012
        %v1014 = vpop.f32.mrf.mxu0
        %v1015 = vadd.f32 %v966, %v1014
        %1016 = vdwg.mxu0
        %1017 = vmatpush.bf16.msra.mxu0 %v837
        %1018 = vmatpush.bf16.msra.mxu0 %v836
        %1019 = vmatpush.bf16.msra.mxu0 %v835
        %1020 = vmatpush.bf16.msra.mxu0 %v834
        %1021 = vmatpush.bf16.msra.mxu0 %v833
        %1022 = vmatpush.bf16.msra.mxu0 %v832
        %1023 = vmatpush.bf16.msra.mxu0 %v831
        %1024 = vmatpush.bf16.msra.mxu0 %v830
        %1025 = vmatmul.bf16.gmra.mxu0 %v617
        %v1026 = vpop.f32.mrf.mxu0
        %v1027 = vadd.f32 %v978, %v1026
        %v1028 = vpop.f32.mrf.mxu0
        %v1029 = vadd.f32 %v980, %v1028
        %1030 = vmatmul.bf16.gmra.mxu0 %v621
        %v1031 = vpop.f32.mrf.mxu0
        %v1032 = vadd.f32 %v983, %v1031
        %v1033 = vpop.f32.mrf.mxu0
        %v1034 = vadd.f32 %v985, %v1033
        %1035 = vmatmul.bf16.gmra.mxu0 %v625
        %v1036 = vpop.f32.mrf.mxu0
        %v1037 = vadd.f32 %v988, %v1036
        %v1038 = vpop.f32.mrf.mxu0
        %v1039 = vadd.f32 %v990, %v1038
        %1040 = vmatmul.bf16.gmra.mxu0 %v629
        %v1041 = vpop.f32.mrf.mxu0
        %v1042 = vadd.f32 %v993, %v1041
        %v1043 = vpop.f32.mrf.mxu0
        %v1044 = vadd.f32 %v995, %v1043
        %1045 = vmatmul.bf16.gmra.mxu0 %v633
        %v1046 = vpop.f32.mrf.mxu0
        %v1047 = vadd.f32 %v998, %v1046
        %v1048 = vpop.f32.mrf.mxu0
        %v1049 = vadd.f32 %v1000, %v1048
        %1050 = vmatmul.bf16.gmra.mxu0 %v637
        %v1051 = vpop.f32.mrf.mxu0
        %v1052 = vadd.f32 %v1003, %v1051
        %v1053 = vpop.f32.mrf.mxu0
        %v1054 = vadd.f32 %v1005, %v1053
        %1055 = vmatmul.bf16.gmra.mxu0 %v641
        %v1056 = vpop.f32.mrf.mxu0
        %v1057 = vadd.f32 %v1008, %v1056
        %v1058 = vpop.f32.mrf.mxu0
        %v1059 = vadd.f32 %v1010, %v1058
        %1060 = vmatmul.bf16.gmra.mxu0 %v645
        %v1061 = vpop.f32.mrf.mxu0
        %v1062 = vadd.f32 %v1013, %v1061
        %v1063 = vpop.f32.mrf.mxu0
        %v1064 = vadd.f32 %v1015, %v1063
        %1065 = vdwg.mxu0
        %v1066 = vmul.f32 %v1027, 0.2
        %v1067 = vmul.f32 %v1029, 0.2
        %v1068 = vmul.f32 %v1032, 0.2
        %v1069 = vmul.f32 %v1034, 0.2
        %v1070 = vmul.f32 %v1037, 0.2
        %v1071 = vmul.f32 %v1039, 0.2
        %v1072 = vmul.f32 %v1042, 0.2
        %v1073 = vmul.f32 %v1044, 0.2
        %v1074 = vmul.f32 %v1047, 0.2
        %v1075 = vmul.f32 %v1049, 0.2
        %v1076 = vmul.f32 %v1052, 0.2
        %v1077 = vmul.f32 %v1054, 0.2
        %v1078 = vmul.f32 %v1057, 0.2
        %v1079 = vmul.f32 %v1059, 0.2
        %v1080 = vmul.f32 %v1062, 0.2
        %v1081 = vmul.f32 %v1064, 0.2
        %v1082 = vmax.f32 %v1027, %v1066
        %v1083 = vmax.f32 %v1029, %v1067
        %v1084 = vmax.f32 %v1032, %v1068
        %v1085 = vmax.f32 %v1034, %v1069
        %v1086 = vmax.f32 %v1037, %v1070
        %v1087 = vmax.f32 %v1039, %v1071
        %v1088 = vmax.f32 %v1042, %v1072
        %v1089 = vmax.f32 %v1044, %v1073
        %v1090 = vmax.f32 %v1047, %v1074
        %v1091 = vmax.f32 %v1049, %v1075
        %v1092 = vmax.f32 %v1052, %v1076
        %v1093 = vmax.f32 %v1054, %v1077
        %v1094 = vmax.f32 %v1057, %v1078
        %v1095 = vmax.f32 %v1059, %v1079
        %v1096 = vmax.f32 %v1062, %v1080
        %v1097 = vmax.f32 %v1064, %v1081
        %v1098 = vld [vmem:[%s3] sm:$0xf]
        %v1099 = vld [vmem:[%s3 + $0x4] sm:$0xf]
        %v1100 = vld [vmem:[%s3 + $0x8] sm:$0xf]
        %v1101 = vld [vmem:[%s3 + $0xc] sm:$0xf]
        %v1102 = vld [vmem:[%s3 + $0x10] sm:$0xf]
        %v1103 = vld [vmem:[%s3 + $0x14] sm:$0xf]
        %v1104 = vld [vmem:[%s3 + $0x18] sm:$0xf]
        %v1105 = vld [vmem:[%s3 + $0x1c] sm:$0xf]
        %v1106 = vld [vmem:[%s3 + $0x20] sm:$0xf]
        %v1107 = vld [vmem:[%s3 + $0x24] sm:$0xf]
        %v1108 = vld [vmem:[%s3 + $0x28] sm:$0xf]
        %v1109 = vld [vmem:[%s3 + $0x2c] sm:$0xf]
        %v1110 = vld [vmem:[%s3 + $0x30] sm:$0xf]
        %v1111 = vld [vmem:[%s3 + $0x34] sm:$0xf]
        %v1112 = vld [vmem:[%s3 + $0x38] sm:$0xf]
        %v1113 = vld [vmem:[%s3 + $0x3c] sm:$0xf]
        %v1114 = vld [vmem:[%s3 + $0x40] sm:$0xf]
        %v1115 = vld [vmem:[%s3 + $0x44] sm:$0xf]
        %v1116 = vld [vmem:[%s3 + $0x48] sm:$0xf]
        %v1117 = vld [vmem:[%s3 + $0x4c] sm:$0xf]
        %v1118 = vld [vmem:[%s3 + $0x50] sm:$0xf]
        %v1119 = vld [vmem:[%s3 + $0x54] sm:$0xf]
        %v1120 = vld [vmem:[%s3 + $0x58] sm:$0xf]
        %v1121 = vld [vmem:[%s3 + $0x5c] sm:$0xf]
        %v1122 = vld [vmem:[%s3 + $0x60] sm:$0xf]
        %v1123 = vld [vmem:[%s3 + $0x64] sm:$0xf]
        %v1124 = vld [vmem:[%s3 + $0x68] sm:$0xf]
        %v1125 = vld [vmem:[%s3 + $0x6c] sm:$0xf]
        %v1126 = vld [vmem:[%s3 + $0x70] sm:$0xf]
        %v1127 = vld [vmem:[%s3 + $0x74] sm:$0xf]
        %v1128 = vld [vmem:[%s3 + $0x78] sm:$0xf]
        %v1129 = vld [vmem:[%s3 + $0x7c] sm:$0xf]
        %v1130 = vpack.c.bf16 %v1083, %v1082
        %v1131 = vpack.c.bf16 %v1085, %v1084
        %v1132 = vpack.c.bf16 %v1087, %v1086
        %v1133 = vpack.c.bf16 %v1089, %v1088
        %v1134 = vpack.c.bf16 %v1091, %v1090
        %v1135 = vpack.c.bf16 %v1093, %v1092
        %v1136 = vpack.c.bf16 %v1095, %v1094
        %v1137 = vpack.c.bf16 %v1097, %v1096
        %v1170 = vunpack.c.l.b16 %v1098
        %v1171 = vunpack.c.l.b16 %v1099
        %v1172 = vunpack.c.l.b16 %v1100
        %v1173 = vunpack.c.l.b16 %v1101
        %v1174 = vunpack.c.l.b16 %v1102
        %v1175 = vunpack.c.l.b16 %v1103
        %v1176 = vunpack.c.l.b16 %v1104
        %v1177 = vunpack.c.l.b16 %v1105
        %v1178 = vunpack.c.l.b16 %v1106
        %v1179 = vunpack.c.l.b16 %v1107
        %v1180 = vunpack.c.l.b16 %v1108
        %v1181 = vunpack.c.l.b16 %v1109
        %v1182 = vunpack.c.l.b16 %v1110
        %v1183 = vunpack.c.l.b16 %v1111
        %v1184 = vunpack.c.l.b16 %v1112
        %v1185 = vunpack.c.l.b16 %v1113
        %v1186 = vunpack.c.l.b16 %v1114
        %v1187 = vunpack.c.l.b16 %v1115
        %v1188 = vunpack.c.l.b16 %v1116
        %v1189 = vunpack.c.l.b16 %v1117
        %v1190 = vunpack.c.l.b16 %v1118
        %v1191 = vunpack.c.l.b16 %v1119
        %v1192 = vunpack.c.l.b16 %v1120
        %v1193 = vunpack.c.l.b16 %v1121
        %v1194 = vunpack.c.l.b16 %v1122
        %v1195 = vunpack.c.l.b16 %v1123
        %v1196 = vunpack.c.l.b16 %v1124
        %v1197 = vunpack.c.l.b16 %v1125
        %v1198 = vunpack.c.l.b16 %v1126
        %v1199 = vunpack.c.l.b16 %v1127
        %v1200 = vunpack.c.l.b16 %v1128
        %v1201 = vunpack.c.l.b16 %v1129
        %v1202 = vpack.c.b16 %v1171, %v1170
        %v1203 = vpack.c.b16 %v1173, %v1172
        %v1204 = vpack.c.b16 %v1175, %v1174
        %v1205 = vpack.c.b16 %v1177, %v1176
        %v1206 = vpack.c.b16 %v1179, %v1178
        %v1207 = vpack.c.b16 %v1181, %v1180
        %v1208 = vpack.c.b16 %v1183, %v1182
        %v1209 = vpack.c.b16 %v1185, %v1184
        %v1210 = vpack.c.b16 %v1187, %v1186
        %v1211 = vpack.c.b16 %v1189, %v1188
        %v1212 = vpack.c.b16 %v1191, %v1190
        %v1213 = vpack.c.b16 %v1193, %v1192
        %v1214 = vpack.c.b16 %v1195, %v1194
        %v1215 = vpack.c.b16 %v1197, %v1196
        %v1216 = vpack.c.b16 %v1199, %v1198
        %v1217 = vpack.c.b16 %v1201, %v1200
        %1234 = vmatpush.bf16.msra.mxu0 %v1137
        %1235 = vmatpush.bf16.msra.mxu0 %v1136
        %1236 = vmatpush.bf16.msra.mxu0 %v1135
        %1237 = vmatpush.bf16.msra.mxu0 %v1134
        %1238 = vmatpush.bf16.msra.mxu0 %v1133
        %1239 = vmatpush.bf16.msra.mxu0 %v1132
        %1240 = vmatpush.bf16.msra.mxu0 %v1131
        %1241 = vmatpush.bf16.msra.mxu0 %v1130
        %1242 = vmatmul.bf16.gmra.mxu0 %v1202
        %v1243 = vpop.f32.mrf.mxu0
        %v1244 = vadd.f32 0.0, %v1243
        %v1245 = vpop.f32.mrf.mxu0
        %v1246 = vadd.f32 0.0, %v1245
        %1247 = vmatmul.bf16.gmra.mxu0 %v1203
        %v1248 = vpop.f32.mrf.mxu0
        %v1249 = vadd.f32 0.0, %v1248
        %v1250 = vpop.f32.mrf.mxu0
        %v1251 = vadd.f32 0.0, %v1250
        %1252 = vmatmul.bf16.gmra.mxu0 %v1204
        %v1253 = vpop.f32.mrf.mxu0
        %v1254 = vadd.f32 0.0, %v1253
        %v1255 = vpop.f32.mrf.mxu0
        %v1256 = vadd.f32 0.0, %v1255
        %1257 = vmatmul.bf16.gmra.mxu0 %v1205
        %v1258 = vpop.f32.mrf.mxu0
        %v1259 = vadd.f32 0.0, %v1258
        %v1260 = vpop.f32.mrf.mxu0
        %v1261 = vadd.f32 0.0, %v1260
        %1262 = vmatmul.bf16.gmra.mxu0 %v1206
        %v1263 = vpop.f32.mrf.mxu0
        %v1264 = vadd.f32 0.0, %v1263
        %v1265 = vpop.f32.mrf.mxu0
        %v1266 = vadd.f32 0.0, %v1265
        %1267 = vmatmul.bf16.gmra.mxu0 %v1207
        %v1268 = vpop.f32.mrf.mxu0
        %v1269 = vadd.f32 0.0, %v1268
        %v1270 = vpop.f32.mrf.mxu0
        %v1271 = vadd.f32 0.0, %v1270
        %1272 = vmatmul.bf16.gmra.mxu0 %v1208
        %v1273 = vpop.f32.mrf.mxu0
        %v1274 = vadd.f32 0.0, %v1273
        %v1275 = vpop.f32.mrf.mxu0
        %v1276 = vadd.f32 0.0, %v1275
        %1277 = vmatmul.bf16.gmra.mxu0 %v1209
        %v1278 = vpop.f32.mrf.mxu0
        %v1279 = vadd.f32 0.0, %v1278
        %v1280 = vpop.f32.mrf.mxu0
        %v1281 = vadd.f32 0.0, %v1280
        %1282 = vmatmul.bf16.gmra.mxu0 %v1210
        %v1283 = vpop.f32.mrf.mxu0
        %v1284 = vadd.f32 0.0, %v1283
        %v1285 = vpop.f32.mrf.mxu0
        %v1286 = vadd.f32 0.0, %v1285
        %1287 = vmatmul.bf16.gmra.mxu0 %v1211
        %v1288 = vpop.f32.mrf.mxu0
        %v1289 = vadd.f32 0.0, %v1288
        %v1290 = vpop.f32.mrf.mxu0
        %v1291 = vadd.f32 0.0, %v1290
        %1292 = vmatmul.bf16.gmra.mxu0 %v1212
        %v1293 = vpop.f32.mrf.mxu0
        %v1294 = vadd.f32 0.0, %v1293
        %v1295 = vpop.f32.mrf.mxu0
        %v1296 = vadd.f32 0.0, %v1295
        %1297 = vmatmul.bf16.gmra.mxu0 %v1213
        %v1298 = vpop.f32.mrf.mxu0
        %v1299 = vadd.f32 0.0, %v1298
        %v1300 = vpop.f32.mrf.mxu0
        %v1301 = vadd.f32 0.0, %v1300
        %1302 = vmatmul.bf16.gmra.mxu0 %v1214
        %v1303 = vpop.f32.mrf.mxu0
        %v1304 = vadd.f32 0.0, %v1303
        %v1305 = vpop.f32.mrf.mxu0
        %v1306 = vadd.f32 0.0, %v1305
        %1307 = vmatmul.bf16.gmra.mxu0 %v1215
        %v1308 = vpop.f32.mrf.mxu0
        %v1309 = vadd.f32 0.0, %v1308
        %v1310 = vpop.f32.mrf.mxu0
        %v1311 = vadd.f32 0.0, %v1310
        %1312 = vmatmul.bf16.gmra.mxu0 %v1216
        %v1313 = vpop.f32.mrf.mxu0
        %v1314 = vadd.f32 0.0, %v1313
        %v1315 = vpop.f32.mrf.mxu0
        %v1316 = vadd.f32 0.0, %v1315
        %1317 = vmatmul.bf16.gmra.mxu0 %v1217
        %v1318 = vpop.f32.mrf.mxu0
        %v1319 = vadd.f32 0.0, %v1318
        %v1320 = vpop.f32.mrf.mxu0
        %v1321 = vadd.f32 0.0, %v1320
        %1322 = vdwg.mxu0
        %v1323 = vpack.c.bf16 %v1246, %v1244
        %v1324 = vpack.c.bf16 %v1266, %v1264
        %v1325 = vpack.c.bf16 %v1286, %v1284
        %v1326 = vpack.c.bf16 %v1306, %v1304
        %v1327 = vpack.c.bf16 %v1251, %v1249
        %v1328 = vpack.c.bf16 %v1271, %v1269
        %v1329 = vpack.c.bf16 %v1291, %v1289
        %v1330 = vpack.c.bf16 %v1311, %v1309
        %v1331 = vpack.c.bf16 %v1256, %v1254
        %v1332 = vpack.c.bf16 %v1276, %v1274
        %v1333 = vpack.c.bf16 %v1296, %v1294
        %v1334 = vpack.c.bf16 %v1316, %v1314
        %v1335 = vpack.c.bf16 %v1261, %v1259
        %v1336 = vpack.c.bf16 %v1281, %v1279
        %v1337 = vpack.c.bf16 %v1301, %v1299
        %v1338 = vpack.c.bf16 %v1321, %v1319
        %v1339 = vld [vmem:[%s4] sm:$0xf]
        %v1340 = vld [vmem:[%s4 + $0x4] sm:$0xf]
        %v1341 = vld [vmem:[%s4 + $0x8] sm:$0xf]
        %v1342 = vld [vmem:[%s4 + $0xc] sm:$0xf]
        %v1343 = vld [vmem:[%s4 + $0x10] sm:$0xf]
        %v1344 = vld [vmem:[%s4 + $0x14] sm:$0xf]
        %v1345 = vld [vmem:[%s4 + $0x18] sm:$0xf]
        %v1346 = vld [vmem:[%s4 + $0x1c] sm:$0xf]
        %v1347 = vld [vmem:[%s4 + $0x20] sm:$0xf]
        %v1348 = vld [vmem:[%s4 + $0x24] sm:$0xf]
        %v1349 = vld [vmem:[%s4 + $0x28] sm:$0xf]
        %v1350 = vld [vmem:[%s4 + $0x2c] sm:$0xf]
        %v1351 = vld [vmem:[%s4 + $0x30] sm:$0xf]
        %v1352 = vld [vmem:[%s4 + $0x34] sm:$0xf]
        %v1353 = vld [vmem:[%s4 + $0x38] sm:$0xf]
        %v1354 = vld [vmem:[%s4 + $0x3c] sm:$0xf]
        %v1355 = vld [vmem:[%s4 + $0x40] sm:$0xf]
        %v1356 = vld [vmem:[%s4 + $0x44] sm:$0xf]
        %v1357 = vld [vmem:[%s4 + $0x48] sm:$0xf]
        %v1358 = vld [vmem:[%s4 + $0x4c] sm:$0xf]
        %v1359 = vld [vmem:[%s4 + $0x50] sm:$0xf]
        %v1360 = vld [vmem:[%s4 + $0x54] sm:$0xf]
        %v1361 = vld [vmem:[%s4 + $0x58] sm:$0xf]
        %v1362 = vld [vmem:[%s4 + $0x5c] sm:$0xf]
        %v1363 = vld [vmem:[%s4 + $0x60] sm:$0xf]
        %v1364 = vld [vmem:[%s4 + $0x64] sm:$0xf]
        %v1365 = vld [vmem:[%s4 + $0x68] sm:$0xf]
        %v1366 = vld [vmem:[%s4 + $0x6c] sm:$0xf]
        %v1367 = vld [vmem:[%s4 + $0x70] sm:$0xf]
        %v1368 = vld [vmem:[%s4 + $0x74] sm:$0xf]
        %v1369 = vld [vmem:[%s4 + $0x78] sm:$0xf]
        %v1370 = vld [vmem:[%s4 + $0x7c] sm:$0xf]
        %v1371 = vld [vmem:[%s4 + $0x80] sm:$0xf]
        %v1372 = vld [vmem:[%s4 + $0x84] sm:$0xf]
        %v1373 = vld [vmem:[%s4 + $0x88] sm:$0xf]
        %v1374 = vld [vmem:[%s4 + $0x8c] sm:$0xf]
        %v1375 = vld [vmem:[%s4 + $0x90] sm:$0xf]
        %v1376 = vld [vmem:[%s4 + $0x94] sm:$0xf]
        %v1377 = vld [vmem:[%s4 + $0x98] sm:$0xf]
        %v1378 = vld [vmem:[%s4 + $0x9c] sm:$0xf]
        %v1379 = vld [vmem:[%s4 + $0xa0] sm:$0xf]
        %v1380 = vld [vmem:[%s4 + $0xa4] sm:$0xf]
        %v1381 = vld [vmem:[%s4 + $0xa8] sm:$0xf]
        %v1382 = vld [vmem:[%s4 + $0xac] sm:$0xf]
        %v1383 = vld [vmem:[%s4 + $0xb0] sm:$0xf]
        %v1384 = vld [vmem:[%s4 + $0xb4] sm:$0xf]
        %v1385 = vld [vmem:[%s4 + $0xb8] sm:$0xf]
        %v1386 = vld [vmem:[%s4 + $0xbc] sm:$0xf]
        %v1387 = vld [vmem:[%s4 + $0xc0] sm:$0xf]
        %v1388 = vld [vmem:[%s4 + $0xc4] sm:$0xf]
        %v1389 = vld [vmem:[%s4 + $0xc8] sm:$0xf]
        %v1390 = vld [vmem:[%s4 + $0xcc] sm:$0xf]
        %v1391 = vld [vmem:[%s4 + $0xd0] sm:$0xf]
        %v1392 = vld [vmem:[%s4 + $0xd4] sm:$0xf]
        %v1393 = vld [vmem:[%s4 + $0xd8] sm:$0xf]
        %v1394 = vld [vmem:[%s4 + $0xdc] sm:$0xf]
        %v1395 = vld [vmem:[%s4 + $0xe0] sm:$0xf]
        %v1396 = vld [vmem:[%s4 + $0xe4] sm:$0xf]
        %v1397 = vld [vmem:[%s4 + $0xe8] sm:$0xf]
        %v1398 = vld [vmem:[%s4 + $0xec] sm:$0xf]
        %v1399 = vld [vmem:[%s4 + $0xf0] sm:$0xf]
        %v1400 = vld [vmem:[%s4 + $0xf4] sm:$0xf]
        %v1401 = vld [vmem:[%s4 + $0xf8] sm:$0xf]
        %v1402 = vld [vmem:[%s4 + $0xfc] sm:$0xf]
        %v1403 = vld [vmem:[%s5] sm:$0x1]
        %v1405 = vperm.slane %v1403, 0
        %v1471 = vunpack.c.l.b16 %v1339
        %v1472 = vunpack.c.l.b16 %v1340
        %v1473 = vunpack.c.l.b16 %v1341
        %v1474 = vunpack.c.l.b16 %v1342
        %v1475 = vunpack.c.l.b16 %v1343
        %v1476 = vunpack.c.l.b16 %v1344
        %v1477 = vunpack.c.l.b16 %v1345
        %v1478 = vunpack.c.l.b16 %v1346
        %v1479 = vunpack.c.l.b16 %v1347
        %v1480 = vunpack.c.l.b16 %v1348
        %v1481 = vunpack.c.l.b16 %v1349
        %v1482 = vunpack.c.l.b16 %v1350
        %v1483 = vunpack.c.l.b16 %v1351
        %v1484 = vunpack.c.l.b16 %v1352
        %v1485 = vunpack.c.l.b16 %v1353
        %v1486 = vunpack.c.l.b16 %v1354
        %v1487 = vunpack.c.l.b16 %v1355
        %v1488 = vunpack.c.l.b16 %v1356
        %v1489 = vunpack.c.l.b16 %v1357
        %v1490 = vunpack.c.l.b16 %v1358
        %v1491 = vunpack.c.l.b16 %v1359
        %v1492 = vunpack.c.l.b16 %v1360
        %v1493 = vunpack.c.l.b16 %v1361
        %v1494 = vunpack.c.l.b16 %v1362
        %v1495 = vunpack.c.l.b16 %v1363
        %v1496 = vunpack.c.l.b16 %v1364
        %v1497 = vunpack.c.l.b16 %v1365
        %v1498 = vunpack.c.l.b16 %v1366
        %v1499 = vunpack.c.l.b16 %v1367
        %v1500 = vunpack.c.l.b16 %v1368
        %v1501 = vunpack.c.l.b16 %v1369
        %v1502 = vunpack.c.l.b16 %v1370
        %v1503 = vunpack.c.l.b16 %v1371
        %v1504 = vunpack.c.l.b16 %v1372
        %v1505 = vunpack.c.l.b16 %v1373
        %v1506 = vunpack.c.l.b16 %v1374
        %v1507 = vunpack.c.l.b16 %v1375
        %v1508 = vunpack.c.l.b16 %v1376
        %v1509 = vunpack.c.l.b16 %v1377
        %v1510 = vunpack.c.l.b16 %v1378
        %v1511 = vunpack.c.l.b16 %v1379
        %v1512 = vunpack.c.l.b16 %v1380
        %v1513 = vunpack.c.l.b16 %v1381
        %v1514 = vunpack.c.l.b16 %v1382
        %v1515 = vunpack.c.l.b16 %v1383
        %v1516 = vunpack.c.l.b16 %v1384
        %v1517 = vunpack.c.l.b16 %v1385
        %v1518 = vunpack.c.l.b16 %v1386
        %v1519 = vunpack.c.l.b16 %v1387
        %v1520 = vunpack.c.l.b16 %v1388
        %v1521 = vunpack.c.l.b16 %v1389
        %v1522 = vunpack.c.l.b16 %v1390
        %v1523 = vunpack.c.l.b16 %v1391
        %v1524 = vunpack.c.l.b16 %v1392
        %v1525 = vunpack.c.l.b16 %v1393
        %v1526 = vunpack.c.l.b16 %v1394
        %v1527 = vunpack.c.l.b16 %v1395
        %v1528 = vunpack.c.l.b16 %v1396
        %v1529 = vunpack.c.l.b16 %v1397
        %v1530 = vunpack.c.l.b16 %v1398
        %v1531 = vunpack.c.l.b16 %v1399
        %v1532 = vunpack.c.l.b16 %v1400
        %v1533 = vunpack.c.l.b16 %v1401
        %v1534 = vunpack.c.l.b16 %v1402
        %v1535 = vpack.c.b16 %v1472, %v1471
        %v1536 = vpack.c.b16 %v1474, %v1473
        %v1537 = vpack.c.b16 %v1476, %v1475
        %v1538 = vpack.c.b16 %v1478, %v1477
        %v1539 = vpack.c.b16 %v1480, %v1479
        %v1540 = vpack.c.b16 %v1482, %v1481
        %v1541 = vpack.c.b16 %v1484, %v1483
        %v1542 = vpack.c.b16 %v1486, %v1485
        %v1543 = vpack.c.b16 %v1488, %v1487
        %v1544 = vpack.c.b16 %v1490, %v1489
        %v1545 = vpack.c.b16 %v1492, %v1491
        %v1546 = vpack.c.b16 %v1494, %v1493
        %v1547 = vpack.c.b16 %v1496, %v1495
        %v1548 = vpack.c.b16 %v1498, %v1497
        %v1549 = vpack.c.b16 %v1500, %v1499
        %v1550 = vpack.c.b16 %v1502, %v1501
        %v1551 = vpack.c.b16 %v1504, %v1503
        %v1552 = vpack.c.b16 %v1506, %v1505
        %v1553 = vpack.c.b16 %v1508, %v1507
        %v1554 = vpack.c.b16 %v1510, %v1509
        %v1555 = vpack.c.b16 %v1512, %v1511
        %v1556 = vpack.c.b16 %v1514, %v1513
        %v1557 = vpack.c.b16 %v1516, %v1515
        %v1558 = vpack.c.b16 %v1518, %v1517
        %v1559 = vpack.c.b16 %v1520, %v1519
        %v1560 = vpack.c.b16 %v1522, %v1521
        %v1561 = vpack.c.b16 %v1524, %v1523
        %v1562 = vpack.c.b16 %v1526, %v1525
        %v1563 = vpack.c.b16 %v1528, %v1527
        %v1564 = vpack.c.b16 %v1530, %v1529
        %v1565 = vpack.c.b16 %v1532, %v1531
        %v1566 = vpack.c.b16 %v1534, %v1533
        %1599 = vmatpush.bf16.msra.mxu0 %v1542
        %1600 = vmatpush.bf16.msra.mxu0 %v1541
        %1601 = vmatpush.bf16.msra.mxu0 %v1540
        %1602 = vmatpush.bf16.msra.mxu0 %v1539
        %1603 = vmatpush.bf16.msra.mxu0 %v1538
        %1604 = vmatpush.bf16.msra.mxu0 %v1537
        %1605 = vmatpush.bf16.msra.mxu0 %v1536
        %1606 = vmatpush.bf16.msra.mxu0 %v1535
        %1607 = vmatmul.bf16.gmra.mxu0 %v1323
        %v1608 = vpop.f32.mrf.mxu0
        %v1609 = vadd.f32 %v1405, %v1608
        %v1610 = vpop.f32.mrf.mxu0
        %v1611 = vadd.f32 %v1405, %v1610
        %1612 = vmatmul.bf16.gmra.mxu0 %v1327
        %v1613 = vpop.f32.mrf.mxu0
        %v1614 = vadd.f32 %v1405, %v1613
        %v1615 = vpop.f32.mrf.mxu0
        %v1616 = vadd.f32 %v1405, %v1615
        %1617 = vmatmul.bf16.gmra.mxu0 %v1331
        %v1618 = vpop.f32.mrf.mxu0
        %v1619 = vadd.f32 %v1405, %v1618
        %v1620 = vpop.f32.mrf.mxu0
        %v1621 = vadd.f32 %v1405, %v1620
        %1622 = vmatmul.bf16.gmra.mxu0 %v1335
        %v1623 = vpop.f32.mrf.mxu0
        %v1624 = vadd.f32 %v1405, %v1623
        %v1625 = vpop.f32.mrf.mxu0
        %v1626 = vadd.f32 %v1405, %v1625
        %1627 = vdwg.mxu0
        %1628 = vmatpush.bf16.msra.mxu0 %v1550
        %1629 = vmatpush.bf16.msra.mxu0 %v1549
        %1630 = vmatpush.bf16.msra.mxu0 %v1548
        %1631 = vmatpush.bf16.msra.mxu0 %v1547
        %1632 = vmatpush.bf16.msra.mxu0 %v1546
        %1633 = vmatpush.bf16.msra.mxu0 %v1545
        %1634 = vmatpush.bf16.msra.mxu0 %v1544
        %1635 = vmatpush.bf16.msra.mxu0 %v1543
        %1636 = vmatmul.bf16.gmra.mxu0 %v1324
        %v1637 = vpop.f32.mrf.mxu0
        %v1638 = vadd.f32 %v1609, %v1637
        %v1639 = vpop.f32.mrf.mxu0
        %v1640 = vadd.f32 %v1611, %v1639
        %1641 = vmatmul.bf16.gmra.mxu0 %v1328
        %v1642 = vpop.f32.mrf.mxu0
        %v1643 = vadd.f32 %v1614, %v1642
        %v1644 = vpop.f32.mrf.mxu0
        %v1645 = vadd.f32 %v1616, %v1644
        %1646 = vmatmul.bf16.gmra.mxu0 %v1332
        %v1647 = vpop.f32.mrf.mxu0
        %v1648 = vadd.f32 %v1619, %v1647
        %v1649 = vpop.f32.mrf.mxu0
        %v1650 = vadd.f32 %v1621, %v1649
        %1651 = vmatmul.bf16.gmra.mxu0 %v1336
        %v1652 = vpop.f32.mrf.mxu0
        %v1653 = vadd.f32 %v1624, %v1652
        %v1654 = vpop.f32.mrf.mxu0
        %v1655 = vadd.f32 %v1626, %v1654
        %1656 = vdwg.mxu0
        %1657 = vmatpush.bf16.msra.mxu0 %v1558
        %1658 = vmatpush.bf16.msra.mxu0 %v1557
        %1659 = vmatpush.bf16.msra.mxu0 %v1556
        %1660 = vmatpush.bf16.msra.mxu0 %v1555
        %1661 = vmatpush.bf16.msra.mxu0 %v1554
        %1662 = vmatpush.bf16.msra.mxu0 %v1553
        %1663 = vmatpush.bf16.msra.mxu0 %v1552
        %1664 = vmatpush.bf16.msra.mxu0 %v1551
        %1665 = vmatmul.bf16.gmra.mxu0 %v1325
        %v1666 = vpop.f32.mrf.mxu0
        %v1667 = vadd.f32 %v1638, %v1666
        %v1668 = vpop.f32.mrf.mxu0
        %v1669 = vadd.f32 %v1640, %v1668
        %1670 = vmatmul.bf16.gmra.mxu0 %v1329
        %v1671 = vpop.f32.mrf.mxu0
        %v1672 = vadd.f32 %v1643, %v1671
        %v1673 = vpop.f32.mrf.mxu0
        %v1674 = vadd.f32 %v1645, %v1673
        %1675 = vmatmul.bf16.gmra.mxu0 %v1333
        %v1676 = vpop.f32.mrf.mxu0
        %v1677 = vadd.f32 %v1648, %v1676
        %v1678 = vpop.f32.mrf.mxu0
        %v1679 = vadd.f32 %v1650, %v1678
        %1680 = vmatmul.bf16.gmra.mxu0 %v1337
        %v1681 = vpop.f32.mrf.mxu0
        %v1682 = vadd.f32 %v1653, %v1681
        %v1683 = vpop.f32.mrf.mxu0
        %v1684 = vadd.f32 %v1655, %v1683
        %1685 = vdwg.mxu0
        %1686 = vmatpush.bf16.msra.mxu0 %v1566
        %1687 = vmatpush.bf16.msra.mxu0 %v1565
        %1688 = vmatpush.bf16.msra.mxu0 %v1564
        %1689 = vmatpush.bf16.msra.mxu0 %v1563
        %1690 = vmatpush.bf16.msra.mxu0 %v1562
        %1691 = vmatpush.bf16.msra.mxu0 %v1561
        %1692 = vmatpush.bf16.msra.mxu0 %v1560
        %1693 = vmatpush.bf16.msra.mxu0 %v1559
        %1694 = vmatmul.bf16.gmra.mxu0 %v1326
        %v1695 = vpop.f32.mrf.mxu0
        %v1696 = vadd.f32 %v1667, %v1695
        %v1697 = vpop.f32.mrf.mxu0
        %v1698 = vadd.f32 %v1669, %v1697
        %1699 = vmatmul.bf16.gmra.mxu0 %v1330
        %v1700 = vpop.f32.mrf.mxu0
        %v1701 = vadd.f32 %v1672, %v1700
        %v1702 = vpop.f32.mrf.mxu0
        %v1703 = vadd.f32 %v1674, %v1702
        %1704 = vmatmul.bf16.gmra.mxu0 %v1334
        %v1705 = vpop.f32.mrf.mxu0
        %v1706 = vadd.f32 %v1677, %v1705
        %v1707 = vpop.f32.mrf.mxu0
        %v1708 = vadd.f32 %v1679, %v1707
        %1709 = vmatmul.bf16.gmra.mxu0 %v1338
        %v1710 = vpop.f32.mrf.mxu0
        %v1711 = vadd.f32 %v1682, %v1710
        %v1712 = vpop.f32.mrf.mxu0
        %v1713 = vadd.f32 %v1684, %v1712
        %1714 = vdwg.mxu0
        %v1715 = vmul.f32 %v1696, 0.2
        %v1716 = vmul.f32 %v1698, 0.2
        %v1717 = vmul.f32 %v1701, 0.2
        %v1718 = vmul.f32 %v1703, 0.2
        %v1719 = vmul.f32 %v1706, 0.2
        %v1720 = vmul.f32 %v1708, 0.2
        %v1721 = vmul.f32 %v1711, 0.2
        %v1722 = vmul.f32 %v1713, 0.2
        %v1723 = vmax.f32 %v1696, %v1715
        %v1724 = vmax.f32 %v1698, %v1716
        %v1725 = vmax.f32 %v1701, %v1717
        %v1726 = vmax.f32 %v1703, %v1718
        %v1727 = vmax.f32 %v1706, %v1719
        %v1728 = vmax.f32 %v1708, %v1720
        %v1729 = vmax.f32 %v1711, %v1721
        %v1730 = vmax.f32 %v1713, %v1722
        %v1731 = vld [vmem:[%s6] sm:$0xf]
        %v1732 = vld [vmem:[%s6 + $0x4] sm:$0xf]
        %v1733 = vld [vmem:[%s6 + $0x8] sm:$0xf]
        %v1734 = vld [vmem:[%s6 + $0xc] sm:$0xf]
        %v1735 = vld [vmem:[%s6 + $0x10] sm:$0xf]
        %v1736 = vld [vmem:[%s6 + $0x14] sm:$0xf]
        %v1737 = vld [vmem:[%s6 + $0x18] sm:$0xf]
        %v1738 = vld [vmem:[%s6 + $0x1c] sm:$0xf]
        %v1739 = vld [vmem:[%s6 + $0x20] sm:$0xf]
        %v1740 = vld [vmem:[%s6 + $0x24] sm:$0xf]
        %v1741 = vld [vmem:[%s6 + $0x28] sm:$0xf]
        %v1742 = vld [vmem:[%s6 + $0x2c] sm:$0xf]
        %v1743 = vld [vmem:[%s6 + $0x30] sm:$0xf]
        %v1744 = vld [vmem:[%s6 + $0x34] sm:$0xf]
        %v1745 = vld [vmem:[%s6 + $0x38] sm:$0xf]
        %v1746 = vld [vmem:[%s6 + $0x3c] sm:$0xf]
        %v1747 = vpack.c.bf16 %v1724, %v1723
        %v1748 = vpack.c.bf16 %v1726, %v1725
        %v1749 = vpack.c.bf16 %v1728, %v1727
        %v1750 = vpack.c.bf16 %v1730, %v1729
        %v1767 = vunpack.c.l.b16 %v1731
        %v1768 = vunpack.c.l.b16 %v1732
        %v1769 = vunpack.c.l.b16 %v1733
        %v1770 = vunpack.c.l.b16 %v1734
        %v1771 = vunpack.c.l.b16 %v1735
        %v1772 = vunpack.c.l.b16 %v1736
        %v1773 = vunpack.c.l.b16 %v1737
        %v1774 = vunpack.c.l.b16 %v1738
        %v1775 = vunpack.c.l.b16 %v1739
        %v1776 = vunpack.c.l.b16 %v1740
        %v1777 = vunpack.c.l.b16 %v1741
        %v1778 = vunpack.c.l.b16 %v1742
        %v1779 = vunpack.c.l.b16 %v1743
        %v1780 = vunpack.c.l.b16 %v1744
        %v1781 = vunpack.c.l.b16 %v1745
        %v1782 = vunpack.c.l.b16 %v1746
        %v1783 = vpack.c.b16 %v1768, %v1767
        %v1784 = vpack.c.b16 %v1770, %v1769
        %v1785 = vpack.c.b16 %v1772, %v1771
        %v1786 = vpack.c.b16 %v1774, %v1773
        %v1787 = vpack.c.b16 %v1776, %v1775
        %v1788 = vpack.c.b16 %v1778, %v1777
        %v1789 = vpack.c.b16 %v1780, %v1779
        %v1790 = vpack.c.b16 %v1782, %v1781
        %vm1791 = vcmask 523264
        %v1793 = vsel %vm1791, %v1783, 0
        %v1796 = vsel %vm1791, %v1784, 0
        %v1799 = vsel %vm1791, %v1785, 0
        %v1802 = vsel %vm1791, %v1786, 0
        %v1805 = vsel %vm1791, %v1787, 0
        %v1808 = vsel %vm1791, %v1788, 0
        %v1811 = vsel %vm1791, %v1789, 0
        %v1814 = vsel %vm1791, %v1790, 0
        %1816 = vmatpush.bf16.msra.mxu0 0
        %1817 = vmatpush.bf16.msra.mxu0 0
        %1818 = vmatpush.bf16.msra.mxu0 0
        %1819 = vmatpush.bf16.msra.mxu0 0
        %1820 = vmatpush.bf16.msra.mxu0 %v1750
        %1821 = vmatpush.bf16.msra.mxu0 %v1749
        %1822 = vmatpush.bf16.msra.mxu0 %v1748
        %1823 = vmatpush.bf16.msra.mxu0 %v1747
        %1824 = vmatmul.bf16.gmra.mxu0 %v1793
        %v1825 = vpop.f32.mrf.mxu0
        %v1826 = vadd.f32 0.0, %v1825
        %v1827 = vpop.f32.mrf.mxu0
        %v1828 = vadd.f32 0.0, %v1827
        %1829 = vmatmul.bf16.gmra.mxu0 %v1796
        %v1830 = vpop.f32.mrf.mxu0
        %v1831 = vadd.f32 0.0, %v1830
        %v1832 = vpop.f32.mrf.mxu0
        %v1833 = vadd.f32 0.0, %v1832
        %1834 = vmatmul.bf16.gmra.mxu0 %v1799
        %v1835 = vpop.f32.mrf.mxu0
        %v1836 = vadd.f32 0.0, %v1835
        %v1837 = vpop.f32.mrf.mxu0
        %v1838 = vadd.f32 0.0, %v1837
        %1839 = vmatmul.bf16.gmra.mxu0 %v1802
        %v1840 = vpop.f32.mrf.mxu0
        %v1841 = vadd.f32 0.0, %v1840
        %v1842 = vpop.f32.mrf.mxu0
        %v1843 = vadd.f32 0.0, %v1842
        %1844 = vmatmul.bf16.gmra.mxu0 %v1805
        %v1845 = vpop.f32.mrf.mxu0
        %v1846 = vadd.f32 0.0, %v1845
        %v1847 = vpop.f32.mrf.mxu0
        %v1848 = vadd.f32 0.0, %v1847
        %1849 = vmatmul.bf16.gmra.mxu0 %v1808
        %v1850 = vpop.f32.mrf.mxu0
        %v1851 = vadd.f32 0.0, %v1850
        %v1852 = vpop.f32.mrf.mxu0
        %v1853 = vadd.f32 0.0, %v1852
        %1854 = vmatmul.bf16.gmra.mxu0 %v1811
        %v1855 = vpop.f32.mrf.mxu0
        %v1856 = vadd.f32 0.0, %v1855
        %v1857 = vpop.f32.mrf.mxu0
        %v1858 = vadd.f32 0.0, %v1857
        %1859 = vmatmul.bf16.gmra.mxu0 %v1814
        %v1860 = vpop.f32.mrf.mxu0
        %v1861 = vadd.f32 0.0, %v1860
        %v1862 = vpop.f32.mrf.mxu0
        %v1863 = vadd.f32 0.0, %v1862
        %1864 = vdwg.mxu0
        %v1865 = vpack.c.bf16 %v1828, %v1826
        %v1866 = vpack.c.bf16 %v1838, %v1836
        %v1867 = vpack.c.bf16 %v1848, %v1846
        %v1868 = vpack.c.bf16 %v1858, %v1856
        %v1869 = vpack.c.bf16 %v1833, %v1831
        %v1870 = vpack.c.bf16 %v1843, %v1841
        %v1871 = vpack.c.bf16 %v1853, %v1851
        %v1872 = vpack.c.bf16 %v1863, %v1861
        %v1873 = vld [vmem:[%s7] sm:$0xf]
        %v1874 = vld [vmem:[%s7 + $0x4] sm:$0xf]
        %v1875 = vld [vmem:[%s7 + $0x8] sm:$0xf]
        %v1876 = vld [vmem:[%s7 + $0xc] sm:$0xf]
        %v1877 = vld [vmem:[%s7 + $0x10] sm:$0xf]
        %v1878 = vld [vmem:[%s7 + $0x14] sm:$0xf]
        %v1879 = vld [vmem:[%s7 + $0x18] sm:$0xf]
        %v1880 = vld [vmem:[%s7 + $0x1c] sm:$0xf]
        %v1881 = vld [vmem:[%s7 + $0x20] sm:$0xf]
        %v1882 = vld [vmem:[%s7 + $0x24] sm:$0xf]
        %v1883 = vld [vmem:[%s7 + $0x28] sm:$0xf]
        %v1884 = vld [vmem:[%s7 + $0x2c] sm:$0xf]
        %v1885 = vld [vmem:[%s7 + $0x30] sm:$0xf]
        %v1886 = vld [vmem:[%s7 + $0x34] sm:$0xf]
        %v1887 = vld [vmem:[%s7 + $0x38] sm:$0xf]
        %v1888 = vld [vmem:[%s7 + $0x3c] sm:$0xf]
        %v1889 = vld [vmem:[%s7 + $0x40] sm:$0xf]
        %v1890 = vld [vmem:[%s7 + $0x44] sm:$0xf]
        %v1891 = vld [vmem:[%s7 + $0x48] sm:$0xf]
        %v1892 = vld [vmem:[%s7 + $0x4c] sm:$0xf]
        %v1893 = vld [vmem:[%s7 + $0x50] sm:$0xf]
        %v1894 = vld [vmem:[%s7 + $0x54] sm:$0xf]
        %v1895 = vld [vmem:[%s7 + $0x58] sm:$0xf]
        %v1896 = vld [vmem:[%s7 + $0x5c] sm:$0xf]
        %v1897 = vld [vmem:[%s7 + $0x60] sm:$0xf]
        %v1898 = vld [vmem:[%s7 + $0x64] sm:$0xf]
        %v1899 = vld [vmem:[%s7 + $0x68] sm:$0xf]
        %v1900 = vld [vmem:[%s7 + $0x6c] sm:$0xf]
        %v1901 = vld [vmem:[%s7 + $0x70] sm:$0xf]
        %v1902 = vld [vmem:[%s7 + $0x74] sm:$0xf]
        %v1903 = vld [vmem:[%s7 + $0x78] sm:$0xf]
        %v1904 = vld [vmem:[%s7 + $0x7c] sm:$0xf]
        %v1905 = vld [vmem:[%s7 + $0x80] sm:$0xf]
        %v1906 = vld [vmem:[%s7 + $0x84] sm:$0xf]
        %v1907 = vld [vmem:[%s7 + $0x88] sm:$0xf]
        %v1908 = vld [vmem:[%s7 + $0x8c] sm:$0xf]
        %v1909 = vld [vmem:[%s7 + $0x90] sm:$0xf]
        %v1910 = vld [vmem:[%s7 + $0x94] sm:$0xf]
        %v1911 = vld [vmem:[%s7 + $0x98] sm:$0xf]
        %v1912 = vld [vmem:[%s7 + $0x9c] sm:$0xf]
        %v1913 = vld [vmem:[%s7 + $0xa0] sm:$0xf]
        %v1914 = vld [vmem:[%s7 + $0xa4] sm:$0xf]
        %v1915 = vld [vmem:[%s7 + $0xa8] sm:$0xf]
        %v1916 = vld [vmem:[%s7 + $0xac] sm:$0xf]
        %v1917 = vld [vmem:[%s7 + $0xb0] sm:$0xf]
        %v1918 = vld [vmem:[%s7 + $0xb4] sm:$0xf]
        %v1919 = vld [vmem:[%s7 + $0xb8] sm:$0xf]
        %v1920 = vld [vmem:[%s7 + $0xbc] sm:$0xf]
        %v1921 = vld [vmem:[%s7 + $0xc0] sm:$0xf]
        %v1922 = vld [vmem:[%s7 + $0xc4] sm:$0xf]
        %v1923 = vld [vmem:[%s7 + $0xc8] sm:$0xf]
        %v1924 = vld [vmem:[%s7 + $0xcc] sm:$0xf]
        %v1925 = vld [vmem:[%s7 + $0xd0] sm:$0xf]
        %v1926 = vld [vmem:[%s7 + $0xd4] sm:$0xf]
        %v1927 = vld [vmem:[%s7 + $0xd8] sm:$0xf]
        %v1928 = vld [vmem:[%s7 + $0xdc] sm:$0xf]
        %v1929 = vld [vmem:[%s7 + $0xe0] sm:$0xf]
        %v1930 = vld [vmem:[%s7 + $0xe4] sm:$0xf]
        %v1931 = vld [vmem:[%s7 + $0xe8] sm:$0xf]
        %v1932 = vld [vmem:[%s7 + $0xec] sm:$0xf]
        %v1933 = vld [vmem:[%s7 + $0xf0] sm:$0xf]
        %v1934 = vld [vmem:[%s7 + $0xf4] sm:$0xf]
        %v1935 = vld [vmem:[%s7 + $0xf8] sm:$0xf]
        %v1936 = vld [vmem:[%s7 + $0xfc] sm:$0xf]
        %v1937 = vld [vmem:[%s8] sm:$0x1]
        %v1939 = vperm.slane %v1937, 0
        %v2005 = vunpack.c.l.b16 %v1873
        %v2006 = vunpack.c.l.b16 %v1874
        %v2007 = vunpack.c.l.b16 %v1875
        %v2008 = vunpack.c.l.b16 %v1876
        %v2009 = vunpack.c.l.b16 %v1877
        %v2010 = vunpack.c.l.b16 %v1878
        %v2011 = vunpack.c.l.b16 %v1879
        %v2012 = vunpack.c.l.b16 %v1880
        %v2013 = vunpack.c.l.b16 %v1881
        %v2014 = vunpack.c.l.b16 %v1882
        %v2015 = vunpack.c.l.b16 %v1883
        %v2016 = vunpack.c.l.b16 %v1884
        %v2017 = vunpack.c.l.b16 %v1885
        %v2018 = vunpack.c.l.b16 %v1886
        %v2019 = vunpack.c.l.b16 %v1887
        %v2020 = vunpack.c.l.b16 %v1888
        %v2021 = vunpack.c.l.b16 %v1889
        %v2022 = vunpack.c.l.b16 %v1890
        %v2023 = vunpack.c.l.b16 %v1891
        %v2024 = vunpack.c.l.b16 %v1892
        %v2025 = vunpack.c.l.b16 %v1893
        %v2026 = vunpack.c.l.b16 %v1894
        %v2027 = vunpack.c.l.b16 %v1895
        %v2028 = vunpack.c.l.b16 %v1896
        %v2029 = vunpack.c.l.b16 %v1897
        %v2030 = vunpack.c.l.b16 %v1898
        %v2031 = vunpack.c.l.b16 %v1899
        %v2032 = vunpack.c.l.b16 %v1900
        %v2033 = vunpack.c.l.b16 %v1901
        %v2034 = vunpack.c.l.b16 %v1902
        %v2035 = vunpack.c.l.b16 %v1903
        %v2036 = vunpack.c.l.b16 %v1904
        %v2037 = vunpack.c.l.b16 %v1905
        %v2038 = vunpack.c.l.b16 %v1906
        %v2039 = vunpack.c.l.b16 %v1907
        %v2040 = vunpack.c.l.b16 %v1908
        %v2041 = vunpack.c.l.b16 %v1909
        %v2042 = vunpack.c.l.b16 %v1910
        %v2043 = vunpack.c.l.b16 %v1911
        %v2044 = vunpack.c.l.b16 %v1912
        %v2045 = vunpack.c.l.b16 %v1913
        %v2046 = vunpack.c.l.b16 %v1914
        %v2047 = vunpack.c.l.b16 %v1915
        %v2048 = vunpack.c.l.b16 %v1916
        %v2049 = vunpack.c.l.b16 %v1917
        %v2050 = vunpack.c.l.b16 %v1918
        %v2051 = vunpack.c.l.b16 %v1919
        %v2052 = vunpack.c.l.b16 %v1920
        %v2053 = vunpack.c.l.b16 %v1921
        %v2054 = vunpack.c.l.b16 %v1922
        %v2055 = vunpack.c.l.b16 %v1923
        %v2056 = vunpack.c.l.b16 %v1924
        %v2057 = vunpack.c.l.b16 %v1925
        %v2058 = vunpack.c.l.b16 %v1926
        %v2059 = vunpack.c.l.b16 %v1927
        %v2060 = vunpack.c.l.b16 %v1928
        %v2061 = vunpack.c.l.b16 %v1929
        %v2062 = vunpack.c.l.b16 %v1930
        %v2063 = vunpack.c.l.b16 %v1931
        %v2064 = vunpack.c.l.b16 %v1932
        %v2065 = vunpack.c.l.b16 %v1933
        %v2066 = vunpack.c.l.b16 %v1934
        %v2067 = vunpack.c.l.b16 %v1935
        %v2068 = vunpack.c.l.b16 %v1936
        %v2069 = vpack.c.b16 %v2006, %v2005
        %v2070 = vpack.c.b16 %v2008, %v2007
        %v2071 = vpack.c.b16 %v2010, %v2009
        %v2072 = vpack.c.b16 %v2012, %v2011
        %v2073 = vpack.c.b16 %v2014, %v2013
        %v2074 = vpack.c.b16 %v2016, %v2015
        %v2075 = vpack.c.b16 %v2018, %v2017
        %v2076 = vpack.c.b16 %v2020, %v2019
        %v2077 = vpack.c.b16 %v2022, %v2021
        %v2078 = vpack.c.b16 %v2024, %v2023
        %v2079 = vpack.c.b16 %v2026, %v2025
        %v2080 = vpack.c.b16 %v2028, %v2027
        %v2081 = vpack.c.b16 %v2030, %v2029
        %v2082 = vpack.c.b16 %v2032, %v2031
        %v2083 = vpack.c.b16 %v2034, %v2033
        %v2084 = vpack.c.b16 %v2036, %v2035
        %v2085 = vpack.c.b16 %v2038, %v2037
        %v2086 = vpack.c.b16 %v2040, %v2039
        %v2087 = vpack.c.b16 %v2042, %v2041
        %v2088 = vpack.c.b16 %v2044, %v2043
        %v2089 = vpack.c.b16 %v2046, %v2045
        %v2090 = vpack.c.b16 %v2048, %v2047
        %v2091 = vpack.c.b16 %v2050, %v2049
        %v2092 = vpack.c.b16 %v2052, %v2051
        %v2093 = vpack.c.b16 %v2054, %v2053
        %v2094 = vpack.c.b16 %v2056, %v2055
        %v2095 = vpack.c.b16 %v2058, %v2057
        %v2096 = vpack.c.b16 %v2060, %v2059
        %v2097 = vpack.c.b16 %v2062, %v2061
        %v2098 = vpack.c.b16 %v2064, %v2063
        %v2099 = vpack.c.b16 %v2066, %v2065
        %v2100 = vpack.c.b16 %v2068, %v2067
        %2133 = vmatpush.bf16.msra.mxu0 %v2076
        %2134 = vmatpush.bf16.msra.mxu0 %v2075
        %2135 = vmatpush.bf16.msra.mxu0 %v2074
        %2136 = vmatpush.bf16.msra.mxu0 %v2073
        %2137 = vmatpush.bf16.msra.mxu0 %v2072
        %2138 = vmatpush.bf16.msra.mxu0 %v2071
        %2139 = vmatpush.bf16.msra.mxu0 %v2070
        %2140 = vmatpush.bf16.msra.mxu0 %v2069
        %2141 = vmatmul.bf16.gmra.mxu0 %v1865
        %v2142 = vpop.f32.mrf.mxu0
        %v2143 = vadd.f32 %v1939, %v2142
        %v2144 = vpop.f32.mrf.mxu0
        %v2145 = vadd.f32 %v1939, %v2144
        %2146 = vmatmul.bf16.gmra.mxu0 %v1869
        %v2147 = vpop.f32.mrf.mxu0
        %v2148 = vadd.f32 %v1939, %v2147
        %v2149 = vpop.f32.mrf.mxu0
        %v2150 = vadd.f32 %v1939, %v2149
        %2151 = vdwg.mxu0
        %2152 = vmatpush.bf16.msra.mxu0 %v2084
        %2153 = vmatpush.bf16.msra.mxu0 %v2083
        %2154 = vmatpush.bf16.msra.mxu0 %v2082
        %2155 = vmatpush.bf16.msra.mxu0 %v2081
        %2156 = vmatpush.bf16.msra.mxu0 %v2080
        %2157 = vmatpush.bf16.msra.mxu0 %v2079
        %2158 = vmatpush.bf16.msra.mxu0 %v2078
        %2159 = vmatpush.bf16.msra.mxu0 %v2077
        %2160 = vmatmul.bf16.gmra.mxu0 %v1866
        %v2161 = vpop.f32.mrf.mxu0
        %v2162 = vadd.f32 %v2143, %v2161
        %v2163 = vpop.f32.mrf.mxu0
        %v2164 = vadd.f32 %v2145, %v2163
        %2165 = vmatmul.bf16.gmra.mxu0 %v1870
        %v2166 = vpop.f32.mrf.mxu0
        %v2167 = vadd.f32 %v2148, %v2166
        %v2168 = vpop.f32.mrf.mxu0
        %v2169 = vadd.f32 %v2150, %v2168
        %2170 = vdwg.mxu0
        %2171 = vmatpush.bf16.msra.mxu0 %v2092
        %2172 = vmatpush.bf16.msra.mxu0 %v2091
        %2173 = vmatpush.bf16.msra.mxu0 %v2090
        %2174 = vmatpush.bf16.msra.mxu0 %v2089
        %2175 = vmatpush.bf16.msra.mxu0 %v2088
        %2176 = vmatpush.bf16.msra.mxu0 %v2087
        %2177 = vmatpush.bf16.msra.mxu0 %v2086
        %2178 = vmatpush.bf16.msra.mxu0 %v2085
        %2179 = vmatmul.bf16.gmra.mxu0 %v1867
        %v2180 = vpop.f32.mrf.mxu0
        %v2181 = vadd.f32 %v2162, %v2180
        %v2182 = vpop.f32.mrf.mxu0
        %v2183 = vadd.f32 %v2164, %v2182
        %2184 = vmatmul.bf16.gmra.mxu0 %v1871
        %v2185 = vpop.f32.mrf.mxu0
        %v2186 = vadd.f32 %v2167, %v2185
        %v2187 = vpop.f32.mrf.mxu0
        %v2188 = vadd.f32 %v2169, %v2187
        %2189 = vdwg.mxu0
        %2190 = vmatpush.bf16.msra.mxu0 %v2100
        %2191 = vmatpush.bf16.msra.mxu0 %v2099
        %2192 = vmatpush.bf16.msra.mxu0 %v2098
        %2193 = vmatpush.bf16.msra.mxu0 %v2097
        %2194 = vmatpush.bf16.msra.mxu0 %v2096
        %2195 = vmatpush.bf16.msra.mxu0 %v2095
        %2196 = vmatpush.bf16.msra.mxu0 %v2094
        %2197 = vmatpush.bf16.msra.mxu0 %v2093
        %2198 = vmatmul.bf16.gmra.mxu0 %v1868
        %v2199 = vpop.f32.mrf.mxu0
        %v2200 = vadd.f32 %v2181, %v2199
        %v2201 = vpop.f32.mrf.mxu0
        %v2202 = vadd.f32 %v2183, %v2201
        %2203 = vmatmul.bf16.gmra.mxu0 %v1872
        %v2204 = vpop.f32.mrf.mxu0
        %v2205 = vadd.f32 %v2186, %v2204
        %v2206 = vpop.f32.mrf.mxu0
        %v2207 = vadd.f32 %v2188, %v2206
        %2208 = vdwg.mxu0
        %v2209 = vmul.f32 %v2200, 0.2
        %v2210 = vmul.f32 %v2202, 0.2
        %v2211 = vmul.f32 %v2205, 0.2
        %v2212 = vmul.f32 %v2207, 0.2
        %v2213 = vmax.f32 %v2200, %v2209
        %v2214 = vmax.f32 %v2202, %v2210
        %v2215 = vmax.f32 %v2205, %v2211
        %v2216 = vmax.f32 %v2207, %v2212
        %v2217 = vld [vmem:[%s9] sm:$0xf]
        %v2218 = vld [vmem:[%s9 + $0x4] sm:$0xf]
        %v2219 = vld [vmem:[%s9 + $0x8] sm:$0xf]
        %v2220 = vld [vmem:[%s9 + $0xc] sm:$0xf]
        %v2221 = vpack.c.bf16 %v2214, %v2213
        %v2222 = vpack.c.bf16 %v2216, %v2215
        %v2227 = vunpack.c.l.b16 %v2217
        %v2228 = vunpack.c.l.b16 %v2218
        %v2229 = vunpack.c.l.b16 %v2219
        %v2230 = vunpack.c.l.b16 %v2220
        %v2231 = vpack.c.b16 %v2228, %v2227
        %v2232 = vpack.c.b16 %v2230, %v2229
        %vm2233 = vcmask 261120
        %v2235 = vsel %vm2233, %v2231, 0
        %v2238 = vsel %vm2233, %v2232, 0
        %2240 = vmatpush.bf16.msra.mxu0 0
        %2241 = vmatpush.bf16.msra.mxu0 0
        %2242 = vmatpush.bf16.msra.mxu0 0
        %2243 = vmatpush.bf16.msra.mxu0 0
        %2244 = vmatpush.bf16.msra.mxu0 0
        %2245 = vmatpush.bf16.msra.mxu0 0
        %2246 = vmatpush.bf16.msra.mxu0 %v2222
        %2247 = vmatpush.bf16.msra.mxu0 %v2221
        %2248 = vmatmul.bf16.gmra.mxu0 %v2235
        %v2249 = vpop.f32.mrf.mxu0
        %v2250 = vadd.f32 0.0, %v2249
        %v2251 = vpop.f32.mrf.mxu0
        %v2252 = vadd.f32 0.0, %v2251
        %2253 = vmatmul.bf16.gmra.mxu0 %v2238
        %v2254 = vpop.f32.mrf.mxu0
        %v2255 = vadd.f32 0.0, %v2254
        %v2256 = vpop.f32.mrf.mxu0
        %v2257 = vadd.f32 0.0, %v2256
        %2258 = vdwg.mxu0
        %v2259 = vpack.c.bf16 %v2250, %v2250
        %v2260 = vpack.c.bf16 %v2252, %v2252
        %v2261 = vpack.c.bf16 %v2255, %v2255
        %v2262 = vpack.c.bf16 %v2257, %v2257
        %v2263 = vld [vmem:[%s10] sm:$0xf]
        %v2264 = vld [vmem:[%s10 + $0x4] sm:$0xf]
        %v2265 = vld [vmem:[%s10 + $0x8] sm:$0xf]
        %v2266 = vld [vmem:[%s10 + $0xc] sm:$0xf]
        %v2267 = vld [vmem:[%s10 + $0x10] sm:$0xf]
        %v2268 = vld [vmem:[%s10 + $0x14] sm:$0xf]
        %v2269 = vld [vmem:[%s10 + $0x18] sm:$0xf]
        %v2270 = vld [vmem:[%s10 + $0x1c] sm:$0xf]
        %v2271 = vld [vmem:[%s10 + $0x20] sm:$0xf]
        %v2272 = vld [vmem:[%s10 + $0x24] sm:$0xf]
        %v2273 = vld [vmem:[%s10 + $0x28] sm:$0xf]
        %v2274 = vld [vmem:[%s10 + $0x2c] sm:$0xf]
        %v2275 = vld [vmem:[%s10 + $0x30] sm:$0xf]
        %v2276 = vld [vmem:[%s10 + $0x34] sm:$0xf]
        %v2277 = vld [vmem:[%s10 + $0x38] sm:$0xf]
        %v2278 = vld [vmem:[%s10 + $0x3c] sm:$0xf]
        %v2279 = vld [vmem:[%s10 + $0x40] sm:$0xf]
        %v2280 = vld [vmem:[%s10 + $0x44] sm:$0xf]
        %v2281 = vld [vmem:[%s10 + $0x48] sm:$0xf]
        %v2282 = vld [vmem:[%s10 + $0x4c] sm:$0xf]
        %v2283 = vld [vmem:[%s10 + $0x50] sm:$0xf]
        %v2284 = vld [vmem:[%s10 + $0x54] sm:$0xf]
        %v2285 = vld [vmem:[%s10 + $0x58] sm:$0xf]
        %v2286 = vld [vmem:[%s10 + $0x5c] sm:$0xf]
        %v2287 = vld [vmem:[%s10 + $0x60] sm:$0xf]
        %v2288 = vld [vmem:[%s10 + $0x64] sm:$0xf]
        %v2289 = vld [vmem:[%s10 + $0x68] sm:$0xf]
        %v2290 = vld [vmem:[%s10 + $0x6c] sm:$0xf]
        %v2291 = vld [vmem:[%s10 + $0x70] sm:$0xf]
        %v2292 = vld [vmem:[%s10 + $0x74] sm:$0xf]
        %v2293 = vld [vmem:[%s10 + $0x78] sm:$0xf]
        %v2294 = vld [vmem:[%s10 + $0x7c] sm:$0xf]
        %v2295 = vld [vmem:[%s10 + $0x80] sm:$0xf]
        %v2296 = vld [vmem:[%s10 + $0x84] sm:$0xf]
        %v2297 = vld [vmem:[%s10 + $0x88] sm:$0xf]
        %v2298 = vld [vmem:[%s10 + $0x8c] sm:$0xf]
        %v2299 = vld [vmem:[%s10 + $0x90] sm:$0xf]
        %v2300 = vld [vmem:[%s10 + $0x94] sm:$0xf]
        %v2301 = vld [vmem:[%s10 + $0x98] sm:$0xf]
        %v2302 = vld [vmem:[%s10 + $0x9c] sm:$0xf]
        %v2303 = vld [vmem:[%s10 + $0xa0] sm:$0xf]
        %v2304 = vld [vmem:[%s10 + $0xa4] sm:$0xf]
        %v2305 = vld [vmem:[%s10 + $0xa8] sm:$0xf]
        %v2306 = vld [vmem:[%s10 + $0xac] sm:$0xf]
        %v2307 = vld [vmem:[%s10 + $0xb0] sm:$0xf]
        %v2308 = vld [vmem:[%s10 + $0xb4] sm:$0xf]
        %v2309 = vld [vmem:[%s10 + $0xb8] sm:$0xf]
        %v2310 = vld [vmem:[%s10 + $0xbc] sm:$0xf]
        %v2311 = vld [vmem:[%s10 + $0xc0] sm:$0xf]
        %v2312 = vld [vmem:[%s10 + $0xc4] sm:$0xf]
        %v2313 = vld [vmem:[%s10 + $0xc8] sm:$0xf]
        %v2314 = vld [vmem:[%s10 + $0xcc] sm:$0xf]
        %v2315 = vld [vmem:[%s10 + $0xd0] sm:$0xf]
        %v2316 = vld [vmem:[%s10 + $0xd4] sm:$0xf]
        %v2317 = vld [vmem:[%s10 + $0xd8] sm:$0xf]
        %v2318 = vld [vmem:[%s10 + $0xdc] sm:$0xf]
        %v2319 = vld [vmem:[%s10 + $0xe0] sm:$0xf]
        %v2320 = vld [vmem:[%s10 + $0xe4] sm:$0xf]
        %v2321 = vld [vmem:[%s10 + $0xe8] sm:$0xf]
        %v2322 = vld [vmem:[%s10 + $0xec] sm:$0xf]
        %v2323 = vld [vmem:[%s10 + $0xf0] sm:$0xf]
        %v2324 = vld [vmem:[%s10 + $0xf4] sm:$0xf]
        %v2325 = vld [vmem:[%s10 + $0xf8] sm:$0xf]
        %v2326 = vld [vmem:[%s10 + $0xfc] sm:$0xf]
        %v2327 = vld [vmem:[%s11] sm:$0x1]
        %v2329 = vperm.slane %v2327, 0
        %v2395 = vunpack.c.l.b16 %v2263
        %v2396 = vunpack.c.l.b16 %v2264
        %v2397 = vunpack.c.l.b16 %v2265
        %v2398 = vunpack.c.l.b16 %v2266
        %v2399 = vunpack.c.l.b16 %v2267
        %v2400 = vunpack.c.l.b16 %v2268
        %v2401 = vunpack.c.l.b16 %v2269
        %v2402 = vunpack.c.l.b16 %v2270
        %v2403 = vunpack.c.l.b16 %v2271
        %v2404 = vunpack.c.l.b16 %v2272
        %v2405 = vunpack.c.l.b16 %v2273
        %v2406 = vunpack.c.l.b16 %v2274
        %v2407 = vunpack.c.l.b16 %v2275
        %v2408 = vunpack.c.l.b16 %v2276
        %v2409 = vunpack.c.l.b16 %v2277
        %v2410 = vunpack.c.l.b16 %v2278
        %v2411 = vunpack.c.l.b16 %v2279
        %v2412 = vunpack.c.l.b16 %v2280
        %v2413 = vunpack.c.l.b16 %v2281
        %v2414 = vunpack.c.l.b16 %v2282
        %v2415 = vunpack.c.l.b16 %v2283
        %v2416 = vunpack.c.l.b16 %v2284
        %v2417 = vunpack.c.l.b16 %v2285
        %v2418 = vunpack.c.l.b16 %v2286
        %v2419 = vunpack.c.l.b16 %v2287
        %v2420 = vunpack.c.l.b16 %v2288
        %v2421 = vunpack.c.l.b16 %v2289
        %v2422 = vunpack.c.l.b16 %v2290
        %v2423 = vunpack.c.l.b16 %v2291
        %v2424 = vunpack.c.l.b16 %v2292
        %v2425 = vunpack.c.l.b16 %v2293
        %v2426 = vunpack.c.l.b16 %v2294
        %v2427 = vunpack.c.l.b16 %v2295
        %v2428 = vunpack.c.l.b16 %v2296
        %v2429 = vunpack.c.l.b16 %v2297
        %v2430 = vunpack.c.l.b16 %v2298
        %v2431 = vunpack.c.l.b16 %v2299
        %v2432 = vunpack.c.l.b16 %v2300
        %v2433 = vunpack.c.l.b16 %v2301
        %v2434 = vunpack.c.l.b16 %v2302
        %v2435 = vunpack.c.l.b16 %v2303
        %v2436 = vunpack.c.l.b16 %v2304
        %v2437 = vunpack.c.l.b16 %v2305
        %v2438 = vunpack.c.l.b16 %v2306
        %v2439 = vunpack.c.l.b16 %v2307
        %v2440 = vunpack.c.l.b16 %v2308
        %v2441 = vunpack.c.l.b16 %v2309
        %v2442 = vunpack.c.l.b16 %v2310
        %v2443 = vunpack.c.l.b16 %v2311
        %v2444 = vunpack.c.l.b16 %v2312
        %v2445 = vunpack.c.l.b16 %v2313
        %v2446 = vunpack.c.l.b16 %v2314
        %v2447 = vunpack.c.l.b16 %v2315
        %v2448 = vunpack.c.l.b16 %v2316
        %v2449 = vunpack.c.l.b16 %v2317
        %v2450 = vunpack.c.l.b16 %v2318
        %v2451 = vunpack.c.l.b16 %v2319
        %v2452 = vunpack.c.l.b16 %v2320
        %v2453 = vunpack.c.l.b16 %v2321
        %v2454 = vunpack.c.l.b16 %v2322
        %v2455 = vunpack.c.l.b16 %v2323
        %v2456 = vunpack.c.l.b16 %v2324
        %v2457 = vunpack.c.l.b16 %v2325
        %v2458 = vunpack.c.l.b16 %v2326
        %v2459 = vpack.c.b16 %v2396, %v2395
        %v2460 = vpack.c.b16 %v2398, %v2397
        %v2461 = vpack.c.b16 %v2400, %v2399
        %v2462 = vpack.c.b16 %v2402, %v2401
        %v2463 = vpack.c.b16 %v2404, %v2403
        %v2464 = vpack.c.b16 %v2406, %v2405
        %v2465 = vpack.c.b16 %v2408, %v2407
        %v2466 = vpack.c.b16 %v2410, %v2409
        %v2467 = vpack.c.b16 %v2412, %v2411
        %v2468 = vpack.c.b16 %v2414, %v2413
        %v2469 = vpack.c.b16 %v2416, %v2415
        %v2470 = vpack.c.b16 %v2418, %v2417
        %v2471 = vpack.c.b16 %v2420, %v2419
        %v2472 = vpack.c.b16 %v2422, %v2421
        %v2473 = vpack.c.b16 %v2424, %v2423
        %v2474 = vpack.c.b16 %v2426, %v2425
        %v2475 = vpack.c.b16 %v2428, %v2427
        %v2476 = vpack.c.b16 %v2430, %v2429
        %v2477 = vpack.c.b16 %v2432, %v2431
        %v2478 = vpack.c.b16 %v2434, %v2433
        %v2479 = vpack.c.b16 %v2436, %v2435
        %v2480 = vpack.c.b16 %v2438, %v2437
        %v2481 = vpack.c.b16 %v2440, %v2439
        %v2482 = vpack.c.b16 %v2442, %v2441
        %v2483 = vpack.c.b16 %v2444, %v2443
        %v2484 = vpack.c.b16 %v2446, %v2445
        %v2485 = vpack.c.b16 %v2448, %v2447
        %v2486 = vpack.c.b16 %v2450, %v2449
        %v2487 = vpack.c.b16 %v2452, %v2451
        %v2488 = vpack.c.b16 %v2454, %v2453
        %v2489 = vpack.c.b16 %v2456, %v2455
        %v2490 = vpack.c.b16 %v2458, %v2457
        %2523 = vmatpush.bf16.msra.mxu0 %v2466
        %2524 = vmatpush.bf16.msra.mxu0 %v2465
        %2525 = vmatpush.bf16.msra.mxu0 %v2464
        %2526 = vmatpush.bf16.msra.mxu0 %v2463
        %2527 = vmatpush.bf16.msra.mxu0 %v2462
        %2528 = vmatpush.bf16.msra.mxu0 %v2461
        %2529 = vmatpush.bf16.msra.mxu0 %v2460
        %2530 = vmatpush.bf16.msra.mxu0 %v2459
        %2531 = vmatmul.bf16.gmra.mxu0 %v2259
        %v2532 = vpop.f32.mrf.mxu0
        %v2533 = vadd.f32 %v2329, %v2532
        %v2534 = vpop.f32.mrf.mxu0
        %2535 = vdwg.mxu0
        %2536 = vmatpush.bf16.msra.mxu0 %v2474
        %2537 = vmatpush.bf16.msra.mxu0 %v2473
        %2538 = vmatpush.bf16.msra.mxu0 %v2472
        %2539 = vmatpush.bf16.msra.mxu0 %v2471
        %2540 = vmatpush.bf16.msra.mxu0 %v2470
        %2541 = vmatpush.bf16.msra.mxu0 %v2469
        %2542 = vmatpush.bf16.msra.mxu0 %v2468
        %2543 = vmatpush.bf16.msra.mxu0 %v2467
        %2544 = vmatmul.bf16.gmra.mxu0 %v2260
        %v2545 = vpop.f32.mrf.mxu0
        %v2546 = vadd.f32 %v2533, %v2545
        %v2547 = vpop.f32.mrf.mxu0
        %2548 = vdwg.mxu0
        %2549 = vmatpush.bf16.msra.mxu0 %v2482
        %2550 = vmatpush.bf16.msra.mxu0 %v2481
        %2551 = vmatpush.bf16.msra.mxu0 %v2480
        %2552 = vmatpush.bf16.msra.mxu0 %v2479
        %2553 = vmatpush.bf16.msra.mxu0 %v2478
        %2554 = vmatpush.bf16.msra.mxu0 %v2477
        %2555 = vmatpush.bf16.msra.mxu0 %v2476
        %2556 = vmatpush.bf16.msra.mxu0 %v2475
        %2557 = vmatmul.bf16.gmra.mxu0 %v2261
        %v2558 = vpop.f32.mrf.mxu0
        %v2559 = vadd.f32 %v2546, %v2558
        %v2560 = vpop.f32.mrf.mxu0
        %2561 = vdwg.mxu0
        %2562 = vmatpush.bf16.msra.mxu0 %v2490
        %2563 = vmatpush.bf16.msra.mxu0 %v2489
        %2564 = vmatpush.bf16.msra.mxu0 %v2488
        %2565 = vmatpush.bf16.msra.mxu0 %v2487
        %2566 = vmatpush.bf16.msra.mxu0 %v2486
        %2567 = vmatpush.bf16.msra.mxu0 %v2485
        %2568 = vmatpush.bf16.msra.mxu0 %v2484
        %2569 = vmatpush.bf16.msra.mxu0 %v2483
        %2570 = vmatmul.bf16.gmra.mxu0 %v2262
        %v2571 = vpop.f32.mrf.mxu0
        %v2572 = vadd.f32 %v2559, %v2571
        %v2573 = vpop.f32.mrf.mxu0
        %2574 = vdwg.mxu0
        %2575 = vst [vmem:[%s409] sm:$0xff] %v2572
        %s2576 = sand.u32 %s291, 1
        %s2577 = scalar_lea.sflag [#allocation3], %s2576
        %s2578 = sand.u32 %s291, 1
        %s2579 = smul.addr %s2578, 8
        %s2580 = scalar_lea.vmem [#allocation2], %s2579
        // Predicated region
        $region69: #{encoder_forward.1} parent=67 // pred_check
          %p2581 = pneg %p301
        $region70: #{encoder_forward.1} parent=67 // pred_check_branch
          %2583 = sbr.rel (%p2581) target = $region72
        $region71: #{encoder_forward.1} parent=67 // pred_region
          %2585 = vsyncadd %s2577, 0
          %s2586 = smul.addr %s26, 8
          %s2587 = scalar_lea.hbm %s12, %s2586
          %s2589 = sshll.u32 %s2580, 4
          %s2590 = int_to_ptr.vmem [resolvable:$true] %s2589
          %s2591 = sshll.u32 %s2587, 4
          %s2592 = int_to_ptr.hbm [resolvable:$true] %s2591
          %2594 = dma.vmem_to_hbm [thread:$0]  %s2590, 128, %s2592, %s2577
        $region72: #{encoder_forward.1} parent=67 // pred_fallthru
          _
      $region68: #{encoder_forward.1} parent=5 // pred_fallthru
        _
      %p2595 = scmp.le.s32.totalorder 2, %s21
      // Predicated region
      $region73: #{encoder_forward.1} parent=5 // pred_check
        %p2596 = pneg %p2595
      $region74: #{encoder_forward.1} parent=5 // pred_check_branch
        %2598 = sbr.rel (%p2596) target = $region76
      $region75: #{encoder_forward.1} parent=5 // pred_region
        %s2599 = ssub.s32 %s21, 2
        // Predicated region
        $region77: #{encoder_forward.1} parent=75 // pred_check
          %p2600 = pneg %p307
        $region78: #{encoder_forward.1} parent=75 // pred_check_branch
          %2602 = sbr.rel (%p2600) target = $region80
        $region79: #{encoder_forward.1} parent=75 // pred_region
          %s2603 = sand.u32 %s292, 1
          %s2604 = scalar_lea.sflag [#allocation3], %s2603
          %s2605 = sand.u32 %s292, 1
          %s2606 = smul.addr %s2605, 8
          %s2607 = scalar_lea.vmem [#allocation2], %s2606
          %2609 = dma.done %s2604, 128
        $region80: #{encoder_forward.1} parent=75 // pred_fallthru
          _
      $region76: #{encoder_forward.1} parent=5 // pred_fallthru
        _
    $region6: #{encoder_forward.1} parent=1 // loop_footer
      %s25 = sadd.s32 1, %s21
    $region7: #{encoder_forward.1} parent=1 // loop_footer_branch
      %20 = sbr.rel target = $region3
    $region8: #{encoder_forward.1} parent=1 // loop_exit
      _
    %2610 = vsyncpa [#allocation3], 1
    %s2611 = scalar_lea.sflag [#allocation3], 1
    %2612 = vsyncpa %s2611, 1

</llo_original>
